<compile_context>
chip_gen: v7x
topology: tpu7x:2x2x1
jax: 0.10.0
libtpu: 0.0.40
codegen_flags: <defaults>
</compile_context>

<pallas_src>
import math

import jax
import jax.numpy as jnp
from jax.experimental import pallas as pl
from jax.experimental.pallas import tpu as pltpu

_BN_EPS = 1e-5


# ---------------------------------------------------------------------------
# Fused kernel: both heads, conv1x1+BN2d+ReLU -> Linear+BN1d+ReLU.
#
#   x_ref  : (N*HW, C_in)        channels-last rows (NCHW -> NHWC rows)
#   wc_ref : (C_in, 2*C_red)     [value | policy] 1x1-conv weights
#   bc/g2/b2: (1, 2*C_red)       conv bias, BN2d gamma, BN2d beta
#   w3_ref : (HW, 2*C_red, 2*D)  block-diagonal FC weight, flatten order (hw, c)
#   bf/g1/b1: (1, 2*D)           FC bias, BN1d gamma, BN1d beta
#   o_ref  : (N, 2*D)            [actor(value) | critic(policy)]
#   y_scr  : (N*HW, 2*C_red)     VMEM scratch for the stage-1 activation
# ---------------------------------------------------------------------------
def fused_heads_kernel(x_ref, wc_ref, bc_ref, g2_ref, b2_ref,
                       w3_ref, bf_ref, g1_ref, b1_ref, o_ref, y_scr):
    # ---- Stage 1: 1x1 conv (one MXU matmul for both heads) + BN2d + ReLU.
    y = jnp.dot(x_ref[...], wc_ref[...], preferred_element_type=jnp.float32)
    y = y + bc_ref[...]
    mean = jnp.mean(y, axis=0, keepdims=True)                  # per-channel over N*H*W
    var = jnp.mean((y - mean) ** 2, axis=0, keepdims=True)     # biased (train mode)
    scale = g2_ref[...] * jax.lax.rsqrt(var + _BN_EPS)         # fused BN affine
    shift = b2_ref[...] - mean * scale
    y_scr[...] = jnp.maximum(y * scale + shift, 0.0)           # (N*HW, 2*C_red)

    # ---- Stage 2: Linear over the flattened features.
    # z[n, d] = sum_{hw, c} y[n*HW + hw, c] * w3[hw, c, d]
    # (w3 already carries PyTorch's (c, hw) flatten order permuted to (hw, c),
    #  so no activation transpose/reshape is needed at runtime.)
    HW, _, DD = w3_ref.shape
    N = y_scr.shape[0] // HW
    z = jnp.zeros((N, DD), jnp.float32)
    for hw in range(HW):                                        # static unroll
        rows = y_scr[pl.ds(hw, N, stride=HW), :]                # (N, 2*C_red): all samples at spatial hw
        z = z + jnp.dot(rows, w3_ref[hw], preferred_element_type=jnp.float32)
    z = z + bf_ref[...]

    # ---- BN1d (batch stats over N) + ReLU.
    mz = jnp.mean(z, axis=0, keepdims=True)
    vz = jnp.mean((z - mz) ** 2, axis=0, keepdims=True)         # biased (train mode)
    s1 = g1_ref[...] * jax.lax.rsqrt(vz + _BN_EPS)
    sh1 = b1_ref[...] - mz * s1
    o_ref[...] = jnp.maximum(z * s1 + sh1, 0.0)


# ---------------------------------------------------------------------------
# Wrapper: trace-time weight preparation + single pallas_call.
# ---------------------------------------------------------------------------
def prediction_network_forward(x, params):
    N, C_in, H, W = x.shape
    HW = H * W
    pv, pp = params["value"], params["policy"]       # actor uses value branch,
    C_red = pv["conv_w"].shape[0]                    # critic uses policy branch
    D = pv["fc_w"].shape[0]

    # NCHW -> (N*HW, C_in) channels-last rows, computed ONCE for both heads.
    x_rows = jnp.transpose(x, (0, 2, 3, 1)).reshape(N * HW, C_in)

    # Concatenate the two heads' conv / BN2d params along the channel dim.
    conv_w = jnp.concatenate([pv["conv_w"], pp["conv_w"]], axis=0).T      # (C_in, 2C)
    conv_b = jnp.concatenate([pv["conv_b"], pp["conv_b"]])[None, :]
    bn2_g = jnp.concatenate([pv["bn2_g"], pp["bn2_g"]])[None, :]
    bn2_b = jnp.concatenate([pv["bn2_b"], pp["bn2_b"]])[None, :]

    # FC weight: move PyTorch's channel-major flatten order (c*HW + hw) onto
    # the weight at trace time -> (HW, C_red, D), then assemble a
    # block-diagonal (HW, 2*C_red, 2*D) weight so one accumulation produces
    # both heads' outputs as a single lane-dense (N, 2*D) slab.
    def _perm(w):                                    # (D, C_red*HW) -> (HW, C_red, D)
        return jnp.transpose(w.reshape(D, C_red, HW), (2, 1, 0))

    w3 = jnp.zeros((HW, 2 * C_red, 2 * D), jnp.float32)
    w3 = w3.at[:, :C_red, :D].set(_perm(pv["fc_w"]))
    w3 = w3.at[:, C_red:, D:].set(_perm(pp["fc_w"]))

    fc_b = jnp.concatenate([pv["fc_b"], pp["fc_b"]])[None, :]
    bn1_g = jnp.concatenate([pv["bn1_g"], pp["bn1_g"]])[None, :]
    bn1_b = jnp.concatenate([pv["bn1_b"], pp["bn1_b"]])[None, :]

    flops = 2 * (N * HW) * C_in * (2 * C_red) + 2 * HW * N * (2 * C_red) * (2 * D)
    bytes_accessed = 4 * (x_rows.size + conv_w.size + conv_b.size + bn2_g.size
                          + bn2_b.size + w3.size + fc_b.size + bn1_g.size
                          + bn1_b.size + N * 2 * D)

    out = pl.pallas_call(
        fused_heads_kernel,
        out_shape=jax.ShapeDtypeStruct((N, 2 * D), jnp.float32),
        in_specs=[pl.BlockSpec(memory_space=pltpu.MemorySpace.VMEM)] * 9,
        out_specs=pl.BlockSpec(memory_space=pltpu.MemorySpace.VMEM),
        scratch_shapes=[pltpu.VMEM((N * HW, 2 * C_red), jnp.float32)],
        cost_estimate=pl.CostEstimate(
            flops=flops,
            transcendentals=2 * (C_red + D),
            bytes_accessed=bytes_accessed),
    )(x_rows, conv_w, conv_b, bn2_g, bn2_b, w3, fc_b, bn1_g, bn1_b)

    actor = out[:, :D]     # value branch  (forward_actor)
    critic = out[:, D:]    # policy branch (forward_critic)
    return actor, critic


# ---------------------------------------------------------------------------
# Deterministic synthetic parameters (shapes follow the module __init__).
# ---------------------------------------------------------------------------
def make_head_params(key, c_in, c_out, hw, d):
    ks = jax.random.split(key, 8)
    b = c_out * hw
    f32 = jnp.float32
    return dict(
        conv_w=(jax.random.normal(ks[0], (c_out, c_in)) * 0.1).astype(f32),
        conv_b=(jax.random.normal(ks[1], (c_out,)) * 0.1).astype(f32),
        bn2_g=(1.0 + 0.1 * jax.random.normal(ks[2], (c_out,))).astype(f32),
        bn2_b=(0.1 * jax.random.normal(ks[3], (c_out,))).astype(f32),
        fc_w=(jax.random.normal(ks[4], (d, b)) / math.sqrt(b)).astype(f32),
        fc_b=(jax.random.normal(ks[5], (d,)) * 0.1).astype(f32),
        bn1_g=(1.0 + 0.1 * jax.random.normal(ks[6], (d,))).astype(f32),
        bn1_b=(0.1 * jax.random.normal(ks[7], (d,))).astype(f32),
    )


# ---------------------------------------------------------------------------
# Pure-JAX reference (mirrors the PyTorch graph in NCHW) for validation.
# ---------------------------------------------------------------------------
def ref_head(x, p):
    N = x.shape[0]
    y = jnp.einsum("oc,nchw->nohw", p["conv_w"], x) + p["conv_b"][None, :, None, None]
    m = y.mean(axis=(0, 2, 3), keepdims=True)
    v = ((y - m) ** 2).mean(axis=(0, 2, 3), keepdims=True)
    y = (y - m) / jnp.sqrt(v + _BN_EPS) * p["bn2_g"][None, :, None, None] \
        + p["bn2_b"][None, :, None, None]
    y = jnp.maximum(y, 0.0)
    yf = y.reshape(N, -1)                                   # PyTorch view(-1, C*H*W)
    z = yf @ p["fc_w"].T + p["fc_b"]
    mz = z.mean(axis=0, keepdims=True)
    vz = ((z - mz) ** 2).mean(axis=0, keepdims=True)
    z = (z - mz) / jnp.sqrt(vz + _BN_EPS) * p["bn1_g"] + p["bn1_b"]
    return jnp.maximum(z, 0.0)


if __name__ == "__main__":
    # Shapes consistent with the module defaults:
    #   batch=2, num_channels=64, H=W=4
    #   reduced_channels_{policy,value}=32 -> block_output_size = 32*4*4 = 512
    #   last_layer_dim_{pi,vf}=32
    N, C_IN, H, W = 2, 64, 4, 4
    C_RED, D = 32, 32
    HW = H * W

    key = jax.random.PRNGKey(0)
    kx, kp, kv = jax.random.split(key, 3)
    x = jax.random.normal(kx, (N, C_IN, H, W), dtype=jnp.float32)
    params = {
        "policy": make_head_params(kp, C_IN, C_RED, HW, D),
        "value": make_head_params(kv, C_IN, C_RED, HW, D),
    }

    actor, critic = jax.jit(prediction_network_forward)(x, params)
    jax.block_until_ready((actor, critic))

    ref_actor = ref_head(x, params["value"])
    ref_critic = ref_head(x, params["policy"])

    assert actor.shape == (N, D) and critic.shape == (N, D)
    assert jnp.allclose(actor, ref_actor, rtol=1e-4, atol=2e-4), \
        float(jnp.max(jnp.abs(actor - ref_actor)))
    assert jnp.allclose(critic, ref_critic, rtol=1e-4, atol=2e-4), \
        float(jnp.max(jnp.abs(critic - ref_critic)))

    print("KERNEL_OK")
</pallas_src>

<mosaic_0001>
module attributes {stable_mosaic.version = 11 : i64} {
  func.func @fused_heads_kernel(%arg0: memref<32x64xf32, #tpu.memory_space<vmem>>, %arg1: memref<64x64xf32, #tpu.memory_space<vmem>>, %arg2: memref<1x64xf32, #tpu.memory_space<vmem>>, %arg3: memref<1x64xf32, #tpu.memory_space<vmem>>, %arg4: memref<1x64xf32, #tpu.memory_space<vmem>>, %arg5: memref<16x64x64xf32, #tpu.memory_space<vmem>>, %arg6: memref<1x64xf32, #tpu.memory_space<vmem>>, %arg7: memref<1x64xf32, #tpu.memory_space<vmem>>, %arg8: memref<1x64xf32, #tpu.memory_space<vmem>>, %arg9: memref<2x64xf32, #tpu.memory_space<vmem>>, %arg10: memref<32x64xf32, #tpu.memory_space<vmem>>) attributes {dimension_semantics = [], scalar_prefetch = 0 : i64, scratch_operands = 1 : i64, tpu.core_type = #tpu.core_type<tc>} {
    %c0 = arith.constant 0 : index
    %c0_0 = arith.constant 0 : index
    %0 = vector.load %arg0[%c0, %c0_0] : memref<32x64xf32, #tpu.memory_space<vmem>>, vector<32x64xf32>
    %c0_1 = arith.constant 0 : index
    %c0_2 = arith.constant 0 : index
    %1 = vector.load %arg1[%c0_1, %c0_2] : memref<64x64xf32, #tpu.memory_space<vmem>>, vector<64x64xf32>
    %cst = arith.constant dense<0.000000e+00> : vector<32x64xf32>
    %2 = tpu.matmul %0, %1, %cst {dimension_numbers = #tpu.dot_dimension_numbers<[1], [0], [0], [1], [0, 0, 1, 1], [], []>} : vector<32x64xf32>, vector<64x64xf32>, vector<32x64xf32> -> vector<32x64xf32>
    %c0_3 = arith.constant 0 : index
    %c0_4 = arith.constant 0 : index
    %3 = vector.load %arg2[%c0_3, %c0_4] : memref<1x64xf32, #tpu.memory_space<vmem>>, vector<1x64xf32>
    %4 = vector.broadcast %3 : vector<1x64xf32> to vector<32x64xf32>
    %5 = arith.addf %2, %4 : vector<32x64xf32>
    %cst_5 = arith.constant dense<0.000000e+00> : vector<64xf32>
    %6 = vector.multi_reduction <add>, %5, %cst_5 [0] : vector<32x64xf32> to vector<64xf32>
    %7 = vector.shape_cast %6 : vector<64xf32> to vector<1x64xf32>
    %cst_6 = arith.constant 3.200000e+01 : f32
    %8 = vector.broadcast %cst_6 : f32 to vector<1x64xf32>
    %9 = arith.divf %7, %8 : vector<1x64xf32>
    %10 = vector.broadcast %9 : vector<1x64xf32> to vector<32x64xf32>
    %11 = arith.subf %5, %10 : vector<32x64xf32>
    %12 = arith.mulf %11, %11 : vector<32x64xf32>
    %cst_7 = arith.constant dense<0.000000e+00> : vector<64xf32>
    %13 = vector.multi_reduction <add>, %12, %cst_7 [0] : vector<32x64xf32> to vector<64xf32>
    %14 = vector.shape_cast %13 : vector<64xf32> to vector<1x64xf32>
    %cst_8 = arith.constant 3.200000e+01 : f32
    %15 = vector.broadcast %cst_8 : f32 to vector<1x64xf32>
    %16 = arith.divf %14, %15 : vector<1x64xf32>
    %c0_9 = arith.constant 0 : index
    %c0_10 = arith.constant 0 : index
    %17 = vector.load %arg3[%c0_9, %c0_10] : memref<1x64xf32, #tpu.memory_space<vmem>>, vector<1x64xf32>
    %cst_11 = arith.constant 9.99999974E-6 : f32
    %18 = vector.broadcast %cst_11 : f32 to vector<1x64xf32>
    %19 = arith.addf %16, %18 : vector<1x64xf32>
    %20 = math.rsqrt %19 : vector<1x64xf32>
    %21 = arith.mulf %17, %20 : vector<1x64xf32>
    %c0_12 = arith.constant 0 : index
    %c0_13 = arith.constant 0 : index
    %22 = vector.load %arg4[%c0_12, %c0_13] : memref<1x64xf32, #tpu.memory_space<vmem>>, vector<1x64xf32>
    %23 = arith.mulf %9, %21 : vector<1x64xf32>
    %24 = arith.subf %22, %23 : vector<1x64xf32>
    %25 = vector.broadcast %21 : vector<1x64xf32> to vector<32x64xf32>
    %26 = arith.mulf %5, %25 : vector<32x64xf32>
    %27 = vector.broadcast %24 : vector<1x64xf32> to vector<32x64xf32>
    %28 = arith.addf %26, %27 : vector<32x64xf32>
    %cst_14 = arith.constant 0.000000e+00 : f32
    %29 = vector.broadcast %cst_14 : f32 to vector<32x64xf32>
    %30 = arith.maximumf %28, %29 : vector<32x64xf32>
    %c0_15 = arith.constant 0 : index
    %c0_16 = arith.constant 0 : index
    %31 = vector.load %arg10[%c0_15, %c0_16] : memref<32x64xf32, #tpu.memory_space<vmem>>, vector<32x64xf32>
    tpu.vector_store %arg10[%c0_15, %c0_16], %30 {strides = array<i32>} : memref<32x64xf32, #tpu.memory_space<vmem>>, vector<32x64xf32>,
    %cst_17 = arith.constant 0.000000e+00 : f32
    %32 = vector.broadcast %cst_17 : f32 to vector<2x64xf32>
    %c0_18 = arith.constant 0 : index
    %c0_19 = arith.constant 0 : index
    %33 = tpu.strided_load %arg10[%c0_18, %c0_19] {strides = array<i32: 16, 1>} : memref<32x64xf32, #tpu.memory_space<vmem>>, vector<2x64xf32>
    %c0_20 = arith.constant 0 : index
    %c0_21 = arith.constant 0 : index
    %c0_22 = arith.constant 0 : index
    %34 = vector.load %arg5[%c0_20, %c0_21, %c0_22] : memref<16x64x64xf32, #tpu.memory_space<vmem>>, vector<1x64x64xf32>
    %35 = vector.shape_cast %34 : vector<1x64x64xf32> to vector<64x64xf32>
    %cst_23 = arith.constant dense<0.000000e+00> : vector<2x64xf32>
    %36 = tpu.matmul %33, %35, %cst_23 {dimension_numbers = #tpu.dot_dimension_numbers<[1], [0], [0], [1], [0, 0, 1, 1], [], []>} : vector<2x64xf32>, vector<64x64xf32>, vector<2x64xf32> -> vector<2x64xf32>
    %37 = arith.addf %32, %36 : vector<2x64xf32>
    %c1 = arith.constant 1 : index
    %c0_24 = arith.constant 0 : index
    %38 = tpu.strided_load %arg10[%c1, %c0_24] {strides = array<i32: 16, 1>} : memref<32x64xf32, #tpu.memory_space<vmem>>, vector<2x64xf32>
    %c1_25 = arith.constant 1 : index
    %c0_26 = arith.constant 0 : index
    %c0_27 = arith.constant 0 : index
    %39 = vector.load %arg5[%c1_25, %c0_26, %c0_27] : memref<16x64x64xf32, #tpu.memory_space<vmem>>, vector<1x64x64xf32>
    %40 = vector.shape_cast %39 : vector<1x64x64xf32> to vector<64x64xf32>
    %cst_28 = arith.constant dense<0.000000e+00> : vector<2x64xf32>
    %41 = tpu.matmul %38, %40, %cst_28 {dimension_numbers = #tpu.dot_dimension_numbers<[1], [0], [0], [1], [0, 0, 1, 1], [], []>} : vector<2x64xf32>, vector<64x64xf32>, vector<2x64xf32> -> vector<2x64xf32>
    %42 = arith.addf %37, %41 : vector<2x64xf32>
    %c2 = arith.constant 2 : index
    %c0_29 = arith.constant 0 : index
    %43 = tpu.strided_load %arg10[%c2, %c0_29] {strides = array<i32: 16, 1>} : memref<32x64xf32, #tpu.memory_space<vmem>>, vector<2x64xf32>
    %c2_30 = arith.constant 2 : index
    %c0_31 = arith.constant 0 : index
    %c0_32 = arith.constant 0 : index
    %44 = vector.load %arg5[%c2_30, %c0_31, %c0_32] : memref<16x64x64xf32, #tpu.memory_space<vmem>>, vector<1x64x64xf32>
    %45 = vector.shape_cast %44 : vector<1x64x64xf32> to vector<64x64xf32>
    %cst_33 = arith.constant dense<0.000000e+00> : vector<2x64xf32>
    %46 = tpu.matmul %43, %45, %cst_33 {dimension_numbers = #tpu.dot_dimension_numbers<[1], [0], [0], [1], [0, 0, 1, 1], [], []>} : vector<2x64xf32>, vector<64x64xf32>, vector<2x64xf32> -> vector<2x64xf32>
    %47 = arith.addf %42, %46 : vector<2x64xf32>
    %c3 = arith.constant 3 : index
    %c0_34 = arith.constant 0 : index
    %48 = tpu.strided_load %arg10[%c3, %c0_34] {strides = array<i32: 16, 1>} : memref<32x64xf32, #tpu.memory_space<vmem>>, vector<2x64xf32>
    %c3_35 = arith.constant 3 : index
    %c0_36 = arith.constant 0 : index
    %c0_37 = arith.constant 0 : index
    %49 = vector.load %arg5[%c3_35, %c0_36, %c0_37] : memref<16x64x64xf32, #tpu.memory_space<vmem>>, vector<1x64x64xf32>
    %50 = vector.shape_cast %49 : vector<1x64x64xf32> to vector<64x64xf32>
    %cst_38 = arith.constant dense<0.000000e+00> : vector<2x64xf32>
    %51 = tpu.matmul %48, %50, %cst_38 {dimension_numbers = #tpu.dot_dimension_numbers<[1], [0], [0], [1], [0, 0, 1, 1], [], []>} : vector<2x64xf32>, vector<64x64xf32>, vector<2x64xf32> -> vector<2x64xf32>
    %52 = arith.addf %47, %51 : vector<2x64xf32>
    %c4 = arith.constant 4 : index
    %c0_39 = arith.constant 0 : index
    %53 = tpu.strided_load %arg10[%c4, %c0_39] {strides = array<i32: 16, 1>} : memref<32x64xf32, #tpu.memory_space<vmem>>, vector<2x64xf32>
    %c4_40 = arith.constant 4 : index
    %c0_41 = arith.constant 0 : index
    %c0_42 = arith.constant 0 : index
    %54 = vector.load %arg5[%c4_40, %c0_41, %c0_42] : memref<16x64x64xf32, #tpu.memory_space<vmem>>, vector<1x64x64xf32>
    %55 = vector.shape_cast %54 : vector<1x64x64xf32> to vector<64x64xf32>
    %cst_43 = arith.constant dense<0.000000e+00> : vector<2x64xf32>
    %56 = tpu.matmul %53, %55, %cst_43 {dimension_numbers = #tpu.dot_dimension_numbers<[1], [0], [0], [1], [0, 0, 1, 1], [], []>} : vector<2x64xf32>, vector<64x64xf32>, vector<2x64xf32> -> vector<2x64xf32>
    %57 = arith.addf %52, %56 : vector<2x64xf32>
    %c5 = arith.constant 5 : index
    %c0_44 = arith.constant 0 : index
    %58 = tpu.strided_load %arg10[%c5, %c0_44] {strides = array<i32: 16, 1>} : memref<32x64xf32, #tpu.memory_space<vmem>>, vector<2x64xf32>
    %c5_45 = arith.constant 5 : index
    %c0_46 = arith.constant 0 : index
    %c0_47 = arith.constant 0 : index
    %59 = vector.load %arg5[%c5_45, %c0_46, %c0_47] : memref<16x64x64xf32, #tpu.memory_space<vmem>>, vector<1x64x64xf32>
    %60 = vector.shape_cast %59 : vector<1x64x64xf32> to vector<64x64xf32>
    %cst_48 = arith.constant dense<0.000000e+00> : vector<2x64xf32>
    %61 = tpu.matmul %58, %60, %cst_48 {dimension_numbers = #tpu.dot_dimension_numbers<[1], [0], [0], [1], [0, 0, 1, 1], [], []>} : vector<2x64xf32>, vector<64x64xf32>, vector<2x64xf32> -> vector<2x64xf32>
    %62 = arith.addf %57, %61 : vector<2x64xf32>
    %c6 = arith.constant 6 : index
    %c0_49 = arith.constant 0 : index
    %63 = tpu.strided_load %arg10[%c6, %c0_49] {strides = array<i32: 16, 1>} : memref<32x64xf32, #tpu.memory_space<vmem>>, vector<2x64xf32>
    %c6_50 = arith.constant 6 : index
    %c0_51 = arith.constant 0 : index
    %c0_52 = arith.constant 0 : index
    %64 = vector.load %arg5[%c6_50, %c0_51, %c0_52] : memref<16x64x64xf32, #tpu.memory_space<vmem>>, vector<1x64x64xf32>
    %65 = vector.shape_cast %64 : vector<1x64x64xf32> to vector<64x64xf32>
    %cst_53 = arith.constant dense<0.000000e+00> : vector<2x64xf32>
    %66 = tpu.matmul %63, %65, %cst_53 {dimension_numbers = #tpu.dot_dimension_numbers<[1], [0], [0], [1], [0, 0, 1, 1], [], []>} : vector<2x64xf32>, vector<64x64xf32>, vector<2x64xf32> -> vector<2x64xf32>
    %67 = arith.addf %62, %66 : vector<2x64xf32>
    %c7 = arith.constant 7 : index
    %c0_54 = arith.constant 0 : index
    %68 = tpu.strided_load %arg10[%c7, %c0_54] {strides = array<i32: 16, 1>} : memref<32x64xf32, #tpu.memory_space<vmem>>, vector<2x64xf32>
    %c7_55 = arith.constant 7 : index
    %c0_56 = arith.constant 0 : index
    %c0_57 = arith.constant 0 : index
    %69 = vector.load %arg5[%c7_55, %c0_56, %c0_57] : memref<16x64x64xf32, #tpu.memory_space<vmem>>, vector<1x64x64xf32>
    %70 = vector.shape_cast %69 : vector<1x64x64xf32> to vector<64x64xf32>
    %cst_58 = arith.constant dense<0.000000e+00> : vector<2x64xf32>
    %71 = tpu.matmul %68, %70, %cst_58 {dimension_numbers = #tpu.dot_dimension_numbers<[1], [0], [0], [1], [0, 0, 1, 1], [], []>} : vector<2x64xf32>, vector<64x64xf32>, vector<2x64xf32> -> vector<2x64xf32>
    %72 = arith.addf %67, %71 : vector<2x64xf32>
    %c8 = arith.constant 8 : index
    %c0_59 = arith.constant 0 : index
    %73 = tpu.strided_load %arg10[%c8, %c0_59] {strides = array<i32: 16, 1>} : memref<32x64xf32, #tpu.memory_space<vmem>>, vector<2x64xf32>
    %c8_60 = arith.constant 8 : index
    %c0_61 = arith.constant 0 : index
    %c0_62 = arith.constant 0 : index
    %74 = vector.load %arg5[%c8_60, %c0_61, %c0_62] : memref<16x64x64xf32, #tpu.memory_space<vmem>>, vector<1x64x64xf32>
    %75 = vector.shape_cast %74 : vector<1x64x64xf32> to vector<64x64xf32>
    %cst_63 = arith.constant dense<0.000000e+00> : vector<2x64xf32>
    %76 = tpu.matmul %73, %75, %cst_63 {dimension_numbers = #tpu.dot_dimension_numbers<[1], [0], [0], [1], [0, 0, 1, 1], [], []>} : vector<2x64xf32>, vector<64x64xf32>, vector<2x64xf32> -> vector<2x64xf32>
    %77 = arith.addf %72, %76 : vector<2x64xf32>
    %c9 = arith.constant 9 : index
    %c0_64 = arith.constant 0 : index
    %78 = tpu.strided_load %arg10[%c9, %c0_64] {strides = array<i32: 16, 1>} : memref<32x64xf32, #tpu.memory_space<vmem>>, vector<2x64xf32>
    %c9_65 = arith.constant 9 : index
    %c0_66 = arith.constant 0 : index
    %c0_67 = arith.constant 0 : index
    %79 = vector.load %arg5[%c9_65, %c0_66, %c0_67] : memref<16x64x64xf32, #tpu.memory_space<vmem>>, vector<1x64x64xf32>
    %80 = vector.shape_cast %79 : vector<1x64x64xf32> to vector<64x64xf32>
    %cst_68 = arith.constant dense<0.000000e+00> : vector<2x64xf32>
    %81 = tpu.matmul %78, %80, %cst_68 {dimension_numbers = #tpu.dot_dimension_numbers<[1], [0], [0], [1], [0, 0, 1, 1], [], []>} : vector<2x64xf32>, vector<64x64xf32>, vector<2x64xf32> -> vector<2x64xf32>
    %82 = arith.addf %77, %81 : vector<2x64xf32>
    %c10 = arith.constant 10 : index
    %c0_69 = arith.constant 0 : index
    %83 = tpu.strided_load %arg10[%c10, %c0_69] {strides = array<i32: 16, 1>} : memref<32x64xf32, #tpu.memory_space<vmem>>, vector<2x64xf32>
    %c10_70 = arith.constant 10 : index
    %c0_71 = arith.constant 0 : index
    %c0_72 = arith.constant 0 : index
    %84 = vector.load %arg5[%c10_70, %c0_71, %c0_72] : memref<16x64x64xf32, #tpu.memory_space<vmem>>, vector<1x64x64xf32>
    %85 = vector.shape_cast %84 : vector<1x64x64xf32> to vector<64x64xf32>
    %cst_73 = arith.constant dense<0.000000e+00> : vector<2x64xf32>
    %86 = tpu.matmul %83, %85, %cst_73 {dimension_numbers = #tpu.dot_dimension_numbers<[1], [0], [0], [1], [0, 0, 1, 1], [], []>} : vector<2x64xf32>, vector<64x64xf32>, vector<2x64xf32> -> vector<2x64xf32>
    %87 = arith.addf %82, %86 : vector<2x64xf32>
    %c11 = arith.constant 11 : index
    %c0_74 = arith.constant 0 : index
    %88 = tpu.strided_load %arg10[%c11, %c0_74] {strides = array<i32: 16, 1>} : memref<32x64xf32, #tpu.memory_space<vmem>>, vector<2x64xf32>
    %c11_75 = arith.constant 11 : index
    %c0_76 = arith.constant 0 : index
    %c0_77 = arith.constant 0 : index
    %89 = vector.load %arg5[%c11_75, %c0_76, %c0_77] : memref<16x64x64xf32, #tpu.memory_space<vmem>>, vector<1x64x64xf32>
    %90 = vector.shape_cast %89 : vector<1x64x64xf32> to vector<64x64xf32>
    %cst_78 = arith.constant dense<0.000000e+00> : vector<2x64xf32>
    %91 = tpu.matmul %88, %90, %cst_78 {dimension_numbers = #tpu.dot_dimension_numbers<[1], [0], [0], [1], [0, 0, 1, 1], [], []>} : vector<2x64xf32>, vector<64x64xf32>, vector<2x64xf32> -> vector<2x64xf32>
    %92 = arith.addf %87, %91 : vector<2x64xf32>
    %c12 = arith.constant 12 : index
    %c0_79 = arith.constant 0 : index
    %93 = tpu.strided_load %arg10[%c12, %c0_79] {strides = array<i32: 16, 1>} : memref<32x64xf32, #tpu.memory_space<vmem>>, vector<2x64xf32>
    %c12_80 = arith.constant 12 : index
    %c0_81 = arith.constant 0 : index
    %c0_82 = arith.constant 0 : index
    %94 = vector.load %arg5[%c12_80, %c0_81, %c0_82] : memref<16x64x64xf32, #tpu.memory_space<vmem>>, vector<1x64x64xf32>
    %95 = vector.shape_cast %94 : vector<1x64x64xf32> to vector<64x64xf32>
    %cst_83 = arith.constant dense<0.000000e+00> : vector<2x64xf32>
    %96 = tpu.matmul %93, %95, %cst_83 {dimension_numbers = #tpu.dot_dimension_numbers<[1], [0], [0], [1], [0, 0, 1, 1], [], []>} : vector<2x64xf32>, vector<64x64xf32>, vector<2x64xf32> -> vector<2x64xf32>
    %97 = arith.addf %92, %96 : vector<2x64xf32>
    %c13 = arith.constant 13 : index
    %c0_84 = arith.constant 0 : index
    %98 = tpu.strided_load %arg10[%c13, %c0_84] {strides = array<i32: 16, 1>} : memref<32x64xf32, #tpu.memory_space<vmem>>, vector<2x64xf32>
    %c13_85 = arith.constant 13 : index
    %c0_86 = arith.constant 0 : index
    %c0_87 = arith.constant 0 : index
    %99 = vector.load %arg5[%c13_85, %c0_86, %c0_87] : memref<16x64x64xf32, #tpu.memory_space<vmem>>, vector<1x64x64xf32>
    %100 = vector.shape_cast %99 : vector<1x64x64xf32> to vector<64x64xf32>
    %cst_88 = arith.constant dense<0.000000e+00> : vector<2x64xf32>
    %101 = tpu.matmul %98, %100, %cst_88 {dimension_numbers = #tpu.dot_dimension_numbers<[1], [0], [0], [1], [0, 0, 1, 1], [], []>} : vector<2x64xf32>, vector<64x64xf32>, vector<2x64xf32> -> vector<2x64xf32>
    %102 = arith.addf %97, %101 : vector<2x64xf32>
    %c14 = arith.constant 14 : index
    %c0_89 = arith.constant 0 : index
    %103 = tpu.strided_load %arg10[%c14, %c0_89] {strides = array<i32: 16, 1>} : memref<32x64xf32, #tpu.memory_space<vmem>>, vector<2x64xf32>
    %c14_90 = arith.constant 14 : index
    %c0_91 = arith.constant 0 : index
    %c0_92 = arith.constant 0 : index
    %104 = vector.load %arg5[%c14_90, %c0_91, %c0_92] : memref<16x64x64xf32, #tpu.memory_space<vmem>>, vector<1x64x64xf32>
    %105 = vector.shape_cast %104 : vector<1x64x64xf32> to vector<64x64xf32>
    %cst_93 = arith.constant dense<0.000000e+00> : vector<2x64xf32>
    %106 = tpu.matmul %103, %105, %cst_93 {dimension_numbers = #tpu.dot_dimension_numbers<[1], [0], [0], [1], [0, 0, 1, 1], [], []>} : vector<2x64xf32>, vector<64x64xf32>, vector<2x64xf32> -> vector<2x64xf32>
    %107 = arith.addf %102, %106 : vector<2x64xf32>
    %c15 = arith.constant 15 : index
    %c0_94 = arith.constant 0 : index
    %108 = tpu.strided_load %arg10[%c15, %c0_94] {strides = array<i32: 16, 1>} : memref<32x64xf32, #tpu.memory_space<vmem>>, vector<2x64xf32>
    %c15_95 = arith.constant 15 : index
    %c0_96 = arith.constant 0 : index
    %c0_97 = arith.constant 0 : index
    %109 = vector.load %arg5[%c15_95, %c0_96, %c0_97] : memref<16x64x64xf32, #tpu.memory_space<vmem>>, vector<1x64x64xf32>
    %110 = vector.shape_cast %109 : vector<1x64x64xf32> to vector<64x64xf32>
    %cst_98 = arith.constant dense<0.000000e+00> : vector<2x64xf32>
    %111 = tpu.matmul %108, %110, %cst_98 {dimension_numbers = #tpu.dot_dimension_numbers<[1], [0], [0], [1], [0, 0, 1, 1], [], []>} : vector<2x64xf32>, vector<64x64xf32>, vector<2x64xf32> -> vector<2x64xf32>
    %112 = arith.addf %107, %111 : vector<2x64xf32>
    %c0_99 = arith.constant 0 : index
    %c0_100 = arith.constant 0 : index
    %113 = vector.load %arg6[%c0_99, %c0_100] : memref<1x64xf32, #tpu.memory_space<vmem>>, vector<1x64xf32>
    %114 = vector.broadcast %113 : vector<1x64xf32> to vector<2x64xf32>
    %115 = arith.addf %112, %114 : vector<2x64xf32>
    %cst_101 = arith.constant dense<0.000000e+00> : vector<64xf32>
    %116 = vector.multi_reduction <add>, %115, %cst_101 [0] : vector<2x64xf32> to vector<64xf32>
    %117 = vector.shape_cast %116 : vector<64xf32> to vector<1x64xf32>
    %cst_102 = arith.constant 2.000000e+00 : f32
    %118 = vector.broadcast %cst_102 : f32 to vector<1x64xf32>
    %119 = arith.divf %117, %118 : vector<1x64xf32>
    %120 = vector.broadcast %119 : vector<1x64xf32> to vector<2x64xf32>
    %121 = arith.subf %115, %120 : vector<2x64xf32>
    %122 = arith.mulf %121, %121 : vector<2x64xf32>
    %cst_103 = arith.constant dense<0.000000e+00> : vector<64xf32>
    %123 = vector.multi_reduction <add>, %122, %cst_103 [0] : vector<2x64xf32> to vector<64xf32>
    %124 = vector.shape_cast %123 : vector<64xf32> to vector<1x64xf32>
    %cst_104 = arith.constant 2.000000e+00 : f32
    %125 = vector.broadcast %cst_104 : f32 to vector<1x64xf32>
    %126 = arith.divf %124, %125 : vector<1x64xf32>
    %c0_105 = arith.constant 0 : index
    %c0_106 = arith.constant 0 : index
    %127 = vector.load %arg7[%c0_105, %c0_106] : memref<1x64xf32, #tpu.memory_space<vmem>>, vector<1x64xf32>
    %cst_107 = arith.constant 9.99999974E-6 : f32
    %128 = vector.broadcast %cst_107 : f32 to vector<1x64xf32>
    %129 = arith.addf %126, %128 : vector<1x64xf32>
    %130 = math.rsqrt %129 : vector<1x64xf32>
    %131 = arith.mulf %127, %130 : vector<1x64xf32>
    %c0_108 = arith.constant 0 : index
    %c0_109 = arith.constant 0 : index
    %132 = vector.load %arg8[%c0_108, %c0_109] : memref<1x64xf32, #tpu.memory_space<vmem>>, vector<1x64xf32>
    %133 = arith.mulf %119, %131 : vector<1x64xf32>
    %134 = arith.subf %132, %133 : vector<1x64xf32>
    %135 = vector.broadcast %131 : vector<1x64xf32> to vector<2x64xf32>
    %136 = arith.mulf %115, %135 : vector<2x64xf32>
    %137 = vector.broadcast %134 : vector<1x64xf32> to vector<2x64xf32>
    %138 = arith.addf %136, %137 : vector<2x64xf32>
    %cst_110 = arith.constant 0.000000e+00 : f32
    %139 = vector.broadcast %cst_110 : f32 to vector<2x64xf32>
    %140 = arith.maximumf %138, %139 : vector<2x64xf32>
    %c0_111 = arith.constant 0 : index
    %c0_112 = arith.constant 0 : index
    %141 = vector.load %arg9[%c0_111, %c0_112] : memref<2x64xf32, #tpu.memory_space<vmem>>, vector<2x64xf32>
    tpu.vector_store %arg9[%c0_111, %c0_112], %140 {strides = array<i32>} : memref<2x64xf32, #tpu.memory_space<vmem>>, vector<2x64xf32>,
    return
  }
}

</mosaic_0001>

<llo_original>
// kernel: prediction_network_forward.1
$region0: #{prediction_network_forward.1}
  #allocation0 [shape = 'u32[]', space=smem, size = 0x4, offset = 0x4, fixed_abs, tag = 'smem constant byte address 0x4 - core index']
  #allocation1 [shape = 'u32[144,128]{1,0:T(1,128)}', space=vmem, size = 0x12000, scoped, tag = 'internal scratch']
  #allocation2 [shape = 'f32[32,64]{1,0:T(8,128)}', space=vmem, size = 0x4000, scoped, tag = 'scratch operand']
  %s0 = inlined_call_operand.vmem [shape: f32[32,64], index: 0, kind: input, shape index: {}]
  %s1 = inlined_call_operand.vmem [shape: f32[64,64], index: 1, kind: input, shape index: {}]
  %s2 = inlined_call_operand.vmem [shape: f32[1,64], index: 2, kind: input, shape index: {}]
  %s3 = inlined_call_operand.vmem [shape: f32[1,64], index: 3, kind: input, shape index: {}]
  %s4 = inlined_call_operand.vmem [shape: f32[1,64], index: 4, kind: input, shape index: {}]
  %s5 = inlined_call_operand.vmem [shape: f32[16,64,64], index: 5, kind: input, shape index: {}]
  %s6 = inlined_call_operand.vmem [shape: f32[1,64], index: 6, kind: input, shape index: {}]
  %s7 = inlined_call_operand.vmem [shape: f32[1,64], index: 7, kind: input, shape index: {}]
  %s8 = inlined_call_operand.vmem [shape: f32[1,64], index: 8, kind: input, shape index: {}]
  %s9 = inlined_call_operand.vmem [shape: f32[2,64], index: 9, kind: output, shape index: {}]
  %s10 = sld [smem:[#allocation0]]
  $region46: #{prediction_network_forward.1} parent=0
    _
  %s12 = ssub.s32 1, %s10
  %s13 = scalar_select 0, %s12, %s10
  // Predicated region
  $region2: #{prediction_network_forward.1} parent=0 // pred_check
    _
  $region3: #{prediction_network_forward.1} parent=0 // pred_check_branch
    %15 = sbr.rel (0) target = $region5
  $region4: #{prediction_network_forward.1} parent=0 // pred_region
    _
  $region5: #{prediction_network_forward.1} parent=0 // pred_fallthru
    _
  // Predicated region
  $region6: #{prediction_network_forward.1} parent=0 // pred_check
    _
  $region7: #{prediction_network_forward.1} parent=0 // pred_check_branch
    %17 = sbr.rel (0) target = $region9
  $region8: #{prediction_network_forward.1} parent=0 // pred_region
    _
  $region9: #{prediction_network_forward.1} parent=0 // pred_fallthru
    _
  // Predicated region
  $region10: #{prediction_network_forward.1} parent=0 // pred_check
    _
  $region11: #{prediction_network_forward.1} parent=0 // pred_check_branch
    %19 = sbr.rel (0) target = $region13
  $region12: #{prediction_network_forward.1} parent=0 // pred_region
    _
  $region13: #{prediction_network_forward.1} parent=0 // pred_fallthru
    _
  // Predicated region
  $region14: #{prediction_network_forward.1} parent=0 // pred_check
    _
  $region15: #{prediction_network_forward.1} parent=0 // pred_check_branch
    %21 = sbr.rel (0) target = $region17
  $region16: #{prediction_network_forward.1} parent=0 // pred_region
    _
  $region17: #{prediction_network_forward.1} parent=0 // pred_fallthru
    _
  // Predicated region
  $region18: #{prediction_network_forward.1} parent=0 // pred_check
    _
  $region19: #{prediction_network_forward.1} parent=0 // pred_check_branch
    %23 = sbr.rel (0) target = $region21
  $region20: #{prediction_network_forward.1} parent=0 // pred_region
    _
  $region21: #{prediction_network_forward.1} parent=0 // pred_fallthru
    _
  // Predicated region
  $region22: #{prediction_network_forward.1} parent=0 // pred_check
    _
  $region23: #{prediction_network_forward.1} parent=0 // pred_check_branch
    %25 = sbr.rel (0) target = $region25
  $region24: #{prediction_network_forward.1} parent=0 // pred_region
    _
  $region25: #{prediction_network_forward.1} parent=0 // pred_fallthru
    _
  // Predicated region
  $region26: #{prediction_network_forward.1} parent=0 // pred_check
    _
  $region27: #{prediction_network_forward.1} parent=0 // pred_check_branch
    %27 = sbr.rel (0) target = $region29
  $region28: #{prediction_network_forward.1} parent=0 // pred_region
    _
  $region29: #{prediction_network_forward.1} parent=0 // pred_fallthru
    _
  // Predicated region
  $region30: #{prediction_network_forward.1} parent=0 // pred_check
    _
  $region31: #{prediction_network_forward.1} parent=0 // pred_check_branch
    %29 = sbr.rel (0) target = $region33
  $region32: #{prediction_network_forward.1} parent=0 // pred_region
    _
  $region33: #{prediction_network_forward.1} parent=0 // pred_fallthru
    _
  // Predicated region
  $region34: #{prediction_network_forward.1} parent=0 // pred_check
    _
  $region35: #{prediction_network_forward.1} parent=0 // pred_check_branch
    %31 = sbr.rel (0) target = $region37
  $region36: #{prediction_network_forward.1} parent=0 // pred_region
    _
  $region37: #{prediction_network_forward.1} parent=0 // pred_fallthru
    _
  %v32 = vld [vmem:[%s0] sm:$0xff]
  %v33 = vld [vmem:[%s0 + $0x8] sm:$0xff]
  %v34 = vld [vmem:[%s0 + $0x10] sm:$0xff]
  %v35 = vld [vmem:[%s0 + $0x18] sm:$0xff]
  %v36 = vld [vmem:[%s1] sm:$0xff]
  %v37 = vld [vmem:[%s1 + $0x8] sm:$0xff]
  %v38 = vld [vmem:[%s1 + $0x10] sm:$0xff]
  %v39 = vld [vmem:[%s1 + $0x18] sm:$0xff]
  %v40 = vld [vmem:[%s1 + $0x20] sm:$0xff]
  %v41 = vld [vmem:[%s1 + $0x28] sm:$0xff]
  %v42 = vld [vmem:[%s1 + $0x30] sm:$0xff]
  %v43 = vld [vmem:[%s1 + $0x38] sm:$0xff]
  %v44 = vld [vmem:[%s2] sm:$0x1]
  %v46 = vlaneseq
  %v47 = vshrl.u32 %v46, 7
  %v48 = vsub.s32 0, %v47
  %v49 = vrot.slane %v44, %v48
  %vm51 = vcmask 523264
  %v53 = vsel %vm51, %v32, 0
  %v56 = vsel %vm51, %v33, 0
  %v59 = vsel %vm51, %v34, 0
  %v62 = vsel %vm51, %v35, 0
  %64 = vmatprep.subr.mxu0 0.0
  %65 = vmatpush1.msra.mxu0 %v36
  %66 = vmatprep.subr.mxu0 0.0
  %67 = vmatpush1.msra.mxu0 %v37
  %68 = vmatprep.subr.mxu0 0.0
  %69 = vmatpush1.msra.mxu0 %v38
  %70 = vmatprep.subr.mxu0 0.0
  %71 = vmatpush1.msra.mxu0 %v39
  %72 = vmatprep.subr.mxu0 0.0
  %73 = vmatpush1.msra.mxu0 %v40
  %74 = vmatprep.subr.mxu0 0.0
  %75 = vmatpush1.msra.mxu0 %v41
  %76 = vmatprep.subr.mxu0 0.0
  %77 = vmatpush1.msra.mxu0 %v42
  %78 = vmatprep.subr.mxu0 0.0
  %79 = vmatpush1.msra.mxu0 %v43
  %80 = vmatprep.subr.mxu0 0.0
  %81 = vmatpush1.msra.mxu0 0.0
  %82 = vmatprep.subr.mxu0 0.0
  %83 = vmatpush1.msra.mxu0 0.0
  %84 = vmatprep.subr.mxu0 0.0
  %85 = vmatpush1.msra.mxu0 0.0
  %86 = vmatprep.subr.mxu0 0.0
  %87 = vmatpush1.msra.mxu0 0.0
  %88 = vmatprep.subr.mxu0 0.0
  %89 = vmatpush1.msra.mxu0 0.0
  %90 = vmatprep.subr.mxu0 0.0
  %91 = vmatpush1.msra.mxu0 0.0
  %92 = vmatprep.subr.mxu0 0.0
  %93 = vmatpush1.msra.mxu0 0.0
  %94 = vmatprep.subr.mxu0 0.0
  %95 = vmatpush1.msra.mxu0 0.0
  %96 = vmatprep.subr.mxu0 0.0
  %97 = vmatpush1.msra.mxu0 0.0
  %98 = vmatprep.subr.mxu0 0.0
  %99 = vmatpush1.msra.mxu0 0.0
  %100 = vmatprep.subr.mxu0 0.0
  %101 = vmatpush1.msra.mxu0 0.0
  %102 = vmatprep.subr.mxu0 0.0
  %103 = vmatpush1.msra.mxu0 0.0
  %104 = vmatprep.subr.mxu0 0.0
  %105 = vmatpush1.msra.mxu0 0.0
  %106 = vmatprep.subr.mxu0 0.0
  %107 = vmatpush1.msra.mxu0 0.0
  %108 = vmatprep.subr.mxu0 0.0
  %109 = vmatpush1.msra.mxu0 0.0
  %110 = vmatprep.subr.mxu0 0.0
  %111 = vmatpush1.msra.mxu0 0.0
  %112 = vmatprep.subr.mxu0 0.0
  %113 = vmatpush1.msra.mxu0 0.0
  %114 = vmatprep.subr.mxu0 0.0
  %115 = vmatpush1.msra.mxu0 0.0
  %116 = vmatprep.subr.mxu0 0.0
  %117 = vmatpush1.msra.mxu0 0.0
  %118 = vmatprep.subr.mxu0 0.0
  %119 = vmatpush1.msra.mxu0 0.0
  %120 = vmatprep.subr.mxu0 0.0
  %121 = vmatpush1.msra.mxu0 0.0
  %122 = vmatprep.subr.mxu0 0.0
  %123 = vmatpush1.msra.mxu0 0.0
  %124 = vmatprep.subr.mxu0 0.0
  %125 = vmatpush1.msra.mxu0 0.0
  %126 = vmatprep.subr.mxu0 0.0
  %127 = vmatpush1.msra.mxu0 0.0
  %128 = vmatprep.mubr.f32.mxu0 0.0
  %129 = vmatmul.mubr.f32.gmra.mrb[0].mxu0 %v53
  %v130 = vpop.f32.mrb[0].mxu0
  %v131 = vadd.f32 %v49, %v130
  %v132 = vpop.f32.mrb[0].mxu0
  %133 = vmatprep.mubr.f32.mxu0 0.0
  %134 = vmatmul.mubr.f32.gmra.mrb[0].mxu0 %v56
  %v135 = vpop.f32.mrb[0].mxu0
  %v136 = vadd.f32 %v49, %v135
  %v137 = vpop.f32.mrb[0].mxu0
  %138 = vmatprep.mubr.f32.mxu0 0.0
  %139 = vmatmul.mubr.f32.gmra.mrb[0].mxu0 %v59
  %v140 = vpop.f32.mrb[0].mxu0
  %v141 = vadd.f32 %v49, %v140
  %v142 = vpop.f32.mrb[0].mxu0
  %143 = vmatprep.mubr.f32.mxu0 0.0
  %144 = vmatmul.mubr.f32.gmra.mrb[0].mxu0 %v62
  %v145 = vpop.f32.mrb[0].mxu0
  %v146 = vadd.f32 %v49, %v145
  %v147 = vpop.f32.mrb[0].mxu0
  %148 = vdwg.mxu0
  %v149 = vsel %vm51, %v131, 0.0
  %v150 = vsel %vm51, %v136, 0.0
  %v151 = vadd.f32 %v149, %v150
  %v152 = vsel %vm51, %v141, 0.0
  %v153 = vadd.f32 %v151, %v152
  %v154 = vsel %vm51, %v146, 0.0
  %v155 = vadd.f32 %v153, %v154
  %v156 = vrot.slane %v155, 4
  %v157 = vadd.f32 %v155, %v156
  %v158 = vrot.slane %v157, 2
  %v159 = vadd.f32 %v157, %v158
  %v160 = vrot.slane %v159, 1
  %v161 = vadd.f32 %v159, %v160
  %v162 = vrcp.pop 32.0
  %v163 = vmul.f32 %v161, %v162
  %v164 = vsub.f32 %v131, %v163
  %v165 = vsub.f32 %v136, %v163
  %v166 = vsub.f32 %v141, %v163
  %v167 = vsub.f32 %v146, %v163
  %v168 = vmul.f32 %v164, %v164
  %v169 = vmul.f32 %v165, %v165
  %v170 = vmul.f32 %v166, %v166
  %v171 = vmul.f32 %v167, %v167
  %v172 = vsel %vm51, %v168, 0.0
  %v173 = vsel %vm51, %v169, 0.0
  %v174 = vadd.f32 %v172, %v173
  %v175 = vsel %vm51, %v170, 0.0
  %v176 = vadd.f32 %v174, %v175
  %v177 = vsel %vm51, %v171, 0.0
  %v178 = vadd.f32 %v176, %v177
  %v179 = vrot.slane %v178, 4
  %v180 = vadd.f32 %v178, %v179
  %v181 = vrot.slane %v180, 2
  %v182 = vadd.f32 %v180, %v181
  %v183 = vrot.slane %v182, 1
  %v184 = vadd.f32 %v182, %v183
  %v185 = vmul.f32 %v184, %v162
  %v186 = vld [vmem:[%s3] sm:$0x1]
  %v187 = vadd.f32 %v185, 1e-05
  %v188 = vrsqrt.pop %v187
  %v189 = vmul.f32 %v186, %v188
  %v190 = vld [vmem:[%s4] sm:$0x1]
  %v191 = vmul.f32 %v163, %v189
  %v192 = vsub.f32 %v190, %v191
  %v194 = vlaneseq
  %v195 = vshrl.u32 %v194, 7
  %v196 = vsub.s32 0, %v195
  %v197 = vrot.slane %v189, %v196
  %v199 = vmul.f32 %v131, %v197
  %v200 = vmul.f32 %v136, %v197
  %v201 = vmul.f32 %v141, %v197
  %v202 = vmul.f32 %v146, %v197
  %v204 = vlaneseq
  %v205 = vshrl.u32 %v204, 7
  %v206 = vsub.s32 0, %v205
  %v207 = vrot.slane %v192, %v206
  %v209 = vadd.f32 %v199, %v207
  %v210 = vadd.f32 %v200, %v207
  %v211 = vadd.f32 %v201, %v207
  %v212 = vadd.f32 %v202, %v207
  %v213 = vmax.f32 %v209, 0.0
  %v214 = vmax.f32 %v210, 0.0
  %v215 = vmax.f32 %v211, 0.0
  %v216 = vmax.f32 %v212, 0.0
  %217 = vst.msk [vmem:[#allocation2] sm:$0xff] %vm51, %v213
  %218 = vst.msk [vmem:[#allocation2 + $0x8] sm:$0xff] %vm51, %v214
  %219 = vst.msk [vmem:[#allocation2 + $0x10] sm:$0xff] %vm51, %v215
  %220 = vst.msk [vmem:[#allocation2 + $0x18] sm:$0xff] %vm51, %v216
  %v221 = vld [vmem:[#allocation2] ss:$16 sm:$0x3]
  %v222 = vld [vmem:[%s5] sm:$0xff]
  %v223 = vld [vmem:[%s5 + $0x8] sm:$0xff]
  %v224 = vld [vmem:[%s5 + $0x10] sm:$0xff]
  %v225 = vld [vmem:[%s5 + $0x18] sm:$0xff]
  %v226 = vld [vmem:[%s5 + $0x20] sm:$0xff]
  %v227 = vld [vmem:[%s5 + $0x28] sm:$0xff]
  %v228 = vld [vmem:[%s5 + $0x30] sm:$0xff]
  %v229 = vld [vmem:[%s5 + $0x38] sm:$0xff]
  %s230 = scalar_lea.vmem [#allocation2], 1
  %v231 = vld [vmem:[%s230] ss:$16 sm:$0x3]
  %s232 = scalar_lea.vmem %s5, 64
  %v233 = vld [vmem:[%s232] sm:$0xff]
  %v234 = vld [vmem:[%s232 + $0x8] sm:$0xff]
  %v235 = vld [vmem:[%s232 + $0x10] sm:$0xff]
  %v236 = vld [vmem:[%s232 + $0x18] sm:$0xff]
  %v237 = vld [vmem:[%s232 + $0x20] sm:$0xff]
  %v238 = vld [vmem:[%s232 + $0x28] sm:$0xff]
  %v239 = vld [vmem:[%s232 + $0x30] sm:$0xff]
  %v240 = vld [vmem:[%s232 + $0x38] sm:$0xff]
  %v242 = vsel %vm51, %v231, 0
  %244 = vmatprep.subr.mxu0 0.0
  %245 = vmatpush1.msra.mxu0 %v233
  %246 = vmatprep.subr.mxu0 0.0
  %247 = vmatpush1.msra.mxu0 %v234
  %248 = vmatprep.subr.mxu0 0.0
  %249 = vmatpush1.msra.mxu0 %v235
  %250 = vmatprep.subr.mxu0 0.0
  %251 = vmatpush1.msra.mxu0 %v236
  %252 = vmatprep.subr.mxu0 0.0
  %253 = vmatpush1.msra.mxu0 %v237
  %254 = vmatprep.subr.mxu0 0.0
  %255 = vmatpush1.msra.mxu0 %v238
  %256 = vmatprep.subr.mxu0 0.0
  %257 = vmatpush1.msra.mxu0 %v239
  %258 = vmatprep.subr.mxu0 0.0
  %259 = vmatpush1.msra.mxu0 %v240
  %260 = vmatprep.subr.mxu0 0.0
  %261 = vmatpush1.msra.mxu0 0.0
  %262 = vmatprep.subr.mxu0 0.0
  %263 = vmatpush1.msra.mxu0 0.0
  %264 = vmatprep.subr.mxu0 0.0
  %265 = vmatpush1.msra.mxu0 0.0
  %266 = vmatprep.subr.mxu0 0.0
  %267 = vmatpush1.msra.mxu0 0.0
  %268 = vmatprep.subr.mxu0 0.0
  %269 = vmatpush1.msra.mxu0 0.0
  %270 = vmatprep.subr.mxu0 0.0
  %271 = vmatpush1.msra.mxu0 0.0
  %272 = vmatprep.subr.mxu0 0.0
  %273 = vmatpush1.msra.mxu0 0.0
  %274 = vmatprep.subr.mxu0 0.0
  %275 = vmatpush1.msra.mxu0 0.0
  %276 = vmatprep.subr.mxu0 0.0
  %277 = vmatpush1.msra.mxu0 0.0
  %278 = vmatprep.subr.mxu0 0.0
  %279 = vmatpush1.msra.mxu0 0.0
  %280 = vmatprep.subr.mxu0 0.0
  %281 = vmatpush1.msra.mxu0 0.0
  %282 = vmatprep.subr.mxu0 0.0
  %283 = vmatpush1.msra.mxu0 0.0
  %284 = vmatprep.subr.mxu0 0.0
  %285 = vmatpush1.msra.mxu0 0.0
  %286 = vmatprep.subr.mxu0 0.0
  %287 = vmatpush1.msra.mxu0 0.0
  %288 = vmatprep.subr.mxu0 0.0
  %289 = vmatpush1.msra.mxu0 0.0
  %290 = vmatprep.subr.mxu0 0.0
  %291 = vmatpush1.msra.mxu0 0.0
  %292 = vmatprep.subr.mxu0 0.0
  %293 = vmatpush1.msra.mxu0 0.0
  %294 = vmatprep.subr.mxu0 0.0
  %295 = vmatpush1.msra.mxu0 0.0
  %296 = vmatprep.subr.mxu0 0.0
  %297 = vmatpush1.msra.mxu0 0.0
  %298 = vmatprep.subr.mxu0 0.0
  %299 = vmatpush1.msra.mxu0 0.0
  %300 = vmatprep.subr.mxu0 0.0
  %301 = vmatpush1.msra.mxu0 0.0
  %302 = vmatprep.subr.mxu0 0.0
  %303 = vmatpush1.msra.mxu0 0.0
  %304 = vmatprep.subr.mxu0 0.0
  %305 = vmatpush1.msra.mxu0 0.0
  %306 = vmatprep.subr.mxu0 0.0
  %307 = vmatpush1.msra.mxu0 0.0
  %308 = vmatprep.mubr.f32.mxu0 0.0
  %309 = vmatmul.mubr.f32.gmra.mrb[0].mxu0 %v242
  %v310 = vpop.f32.mrb[0].mxu0
  %v311 = vadd.f32 0.0, %v310
  %v312 = vpop.f32.mrb[0].mxu0
  %313 = vdwg.mxu0
  %v315 = vsel %vm51, %v221, 0
  %317 = vmatprep.subr.mxu0 0.0
  %318 = vmatpush1.msra.mxu0 %v222
  %319 = vmatprep.subr.mxu0 0.0
  %320 = vmatpush1.msra.mxu0 %v223
  %321 = vmatprep.subr.mxu0 0.0
  %322 = vmatpush1.msra.mxu0 %v224
  %323 = vmatprep.subr.mxu0 0.0
  %324 = vmatpush1.msra.mxu0 %v225
  %325 = vmatprep.subr.mxu0 0.0
  %326 = vmatpush1.msra.mxu0 %v226
  %327 = vmatprep.subr.mxu0 0.0
  %328 = vmatpush1.msra.mxu0 %v227
  %329 = vmatprep.subr.mxu0 0.0
  %330 = vmatpush1.msra.mxu0 %v228
  %331 = vmatprep.subr.mxu0 0.0
  %332 = vmatpush1.msra.mxu0 %v229
  %333 = vmatprep.subr.mxu0 0.0
  %334 = vmatpush1.msra.mxu0 0.0
  %335 = vmatprep.subr.mxu0 0.0
  %336 = vmatpush1.msra.mxu0 0.0
  %337 = vmatprep.subr.mxu0 0.0
  %338 = vmatpush1.msra.mxu0 0.0
  %339 = vmatprep.subr.mxu0 0.0
  %340 = vmatpush1.msra.mxu0 0.0
  %341 = vmatprep.subr.mxu0 0.0
  %342 = vmatpush1.msra.mxu0 0.0
  %343 = vmatprep.subr.mxu0 0.0
  %344 = vmatpush1.msra.mxu0 0.0
  %345 = vmatprep.subr.mxu0 0.0
  %346 = vmatpush1.msra.mxu0 0.0
  %347 = vmatprep.subr.mxu0 0.0
  %348 = vmatpush1.msra.mxu0 0.0
  %349 = vmatprep.subr.mxu0 0.0
  %350 = vmatpush1.msra.mxu0 0.0
  %351 = vmatprep.subr.mxu0 0.0
  %352 = vmatpush1.msra.mxu0 0.0
  %353 = vmatprep.subr.mxu0 0.0
  %354 = vmatpush1.msra.mxu0 0.0
  %355 = vmatprep.subr.mxu0 0.0
  %356 = vmatpush1.msra.mxu0 0.0
  %357 = vmatprep.subr.mxu0 0.0
  %358 = vmatpush1.msra.mxu0 0.0
  %359 = vmatprep.subr.mxu0 0.0
  %360 = vmatpush1.msra.mxu0 0.0
  %361 = vmatprep.subr.mxu0 0.0
  %362 = vmatpush1.msra.mxu0 0.0
  %363 = vmatprep.subr.mxu0 0.0
  %364 = vmatpush1.msra.mxu0 0.0
  %365 = vmatprep.subr.mxu0 0.0
  %366 = vmatpush1.msra.mxu0 0.0
  %367 = vmatprep.subr.mxu0 0.0
  %368 = vmatpush1.msra.mxu0 0.0
  %369 = vmatprep.subr.mxu0 0.0
  %370 = vmatpush1.msra.mxu0 0.0
  %371 = vmatprep.subr.mxu0 0.0
  %372 = vmatpush1.msra.mxu0 0.0
  %373 = vmatprep.subr.mxu0 0.0
  %374 = vmatpush1.msra.mxu0 0.0
  %375 = vmatprep.subr.mxu0 0.0
  %376 = vmatpush1.msra.mxu0 0.0
  %377 = vmatprep.subr.mxu0 0.0
  %378 = vmatpush1.msra.mxu0 0.0
  %379 = vmatprep.subr.mxu0 0.0
  %380 = vmatpush1.msra.mxu0 0.0
  %381 = vmatprep.mubr.f32.mxu0 0.0
  %382 = vmatmul.mubr.f32.gmra.mrb[0].mxu0 %v315
  %v383 = vpop.f32.mrb[0].mxu0
  %v384 = vadd.f32 %v311, %v383
  %v385 = vpop.f32.mrb[0].mxu0
  %386 = vdwg.mxu0
  %s387 = scalar_lea.vmem [#allocation2], 2
  %v388 = vld [vmem:[%s387] ss:$16 sm:$0x3]
  %s389 = scalar_lea.vmem %s5, 128
  %v390 = vld [vmem:[%s389] sm:$0xff]
  %v391 = vld [vmem:[%s389 + $0x8] sm:$0xff]
  %v392 = vld [vmem:[%s389 + $0x10] sm:$0xff]
  %v393 = vld [vmem:[%s389 + $0x18] sm:$0xff]
  %v394 = vld [vmem:[%s389 + $0x20] sm:$0xff]
  %v395 = vld [vmem:[%s389 + $0x28] sm:$0xff]
  %v396 = vld [vmem:[%s389 + $0x30] sm:$0xff]
  %v397 = vld [vmem:[%s389 + $0x38] sm:$0xff]
  %v399 = vsel %vm51, %v388, 0
  %401 = vmatprep.subr.mxu0 0.0
  %402 = vmatpush1.msra.mxu0 %v390
  %403 = vmatprep.subr.mxu0 0.0
  %404 = vmatpush1.msra.mxu0 %v391
  %405 = vmatprep.subr.mxu0 0.0
  %406 = vmatpush1.msra.mxu0 %v392
  %407 = vmatprep.subr.mxu0 0.0
  %408 = vmatpush1.msra.mxu0 %v393
  %409 = vmatprep.subr.mxu0 0.0
  %410 = vmatpush1.msra.mxu0 %v394
  %411 = vmatprep.subr.mxu0 0.0
  %412 = vmatpush1.msra.mxu0 %v395
  %413 = vmatprep.subr.mxu0 0.0
  %414 = vmatpush1.msra.mxu0 %v396
  %415 = vmatprep.subr.mxu0 0.0
  %416 = vmatpush1.msra.mxu0 %v397
  %417 = vmatprep.subr.mxu0 0.0
  %418 = vmatpush1.msra.mxu0 0.0
  %419 = vmatprep.subr.mxu0 0.0
  %420 = vmatpush1.msra.mxu0 0.0
  %421 = vmatprep.subr.mxu0 0.0
  %422 = vmatpush1.msra.mxu0 0.0
  %423 = vmatprep.subr.mxu0 0.0
  %424 = vmatpush1.msra.mxu0 0.0
  %425 = vmatprep.subr.mxu0 0.0
  %426 = vmatpush1.msra.mxu0 0.0
  %427 = vmatprep.subr.mxu0 0.0
  %428 = vmatpush1.msra.mxu0 0.0
  %429 = vmatprep.subr.mxu0 0.0
  %430 = vmatpush1.msra.mxu0 0.0
  %431 = vmatprep.subr.mxu0 0.0
  %432 = vmatpush1.msra.mxu0 0.0
  %433 = vmatprep.subr.mxu0 0.0
  %434 = vmatpush1.msra.mxu0 0.0
  %435 = vmatprep.subr.mxu0 0.0
  %436 = vmatpush1.msra.mxu0 0.0
  %437 = vmatprep.subr.mxu0 0.0
  %438 = vmatpush1.msra.mxu0 0.0
  %439 = vmatprep.subr.mxu0 0.0
  %440 = vmatpush1.msra.mxu0 0.0
  %441 = vmatprep.subr.mxu0 0.0
  %442 = vmatpush1.msra.mxu0 0.0
  %443 = vmatprep.subr.mxu0 0.0
  %444 = vmatpush1.msra.mxu0 0.0
  %445 = vmatprep.subr.mxu0 0.0
  %446 = vmatpush1.msra.mxu0 0.0
  %447 = vmatprep.subr.mxu0 0.0
  %448 = vmatpush1.msra.mxu0 0.0
  %449 = vmatprep.subr.mxu0 0.0
  %450 = vmatpush1.msra.mxu0 0.0
  %451 = vmatprep.subr.mxu0 0.0
  %452 = vmatpush1.msra.mxu0 0.0
  %453 = vmatprep.subr.mxu0 0.0
  %454 = vmatpush1.msra.mxu0 0.0
  %455 = vmatprep.subr.mxu0 0.0
  %456 = vmatpush1.msra.mxu0 0.0
  %457 = vmatprep.subr.mxu0 0.0
  %458 = vmatpush1.msra.mxu0 0.0
  %459 = vmatprep.subr.mxu0 0.0
  %460 = vmatpush1.msra.mxu0 0.0
  %461 = vmatprep.subr.mxu0 0.0
  %462 = vmatpush1.msra.mxu0 0.0
  %463 = vmatprep.subr.mxu0 0.0
  %464 = vmatpush1.msra.mxu0 0.0
  %465 = vmatprep.mubr.f32.mxu0 0.0
  %466 = vmatmul.mubr.f32.gmra.mrb[0].mxu0 %v399
  %v467 = vpop.f32.mrb[0].mxu0
  %v468 = vadd.f32 0.0, %v467
  %v469 = vpop.f32.mrb[0].mxu0
  %470 = vdwg.mxu0
  %v471 = vadd.f32 %v384, %v468
  %s472 = scalar_lea.vmem [#allocation2], 3
  %v473 = vld [vmem:[%s472] ss:$16 sm:$0x3]
  %s474 = scalar_lea.vmem %s5, 192
  %v475 = vld [vmem:[%s474] sm:$0xff]
  %v476 = vld [vmem:[%s474 + $0x8] sm:$0xff]
  %v477 = vld [vmem:[%s474 + $0x10] sm:$0xff]
  %v478 = vld [vmem:[%s474 + $0x18] sm:$0xff]
  %v479 = vld [vmem:[%s474 + $0x20] sm:$0xff]
  %v480 = vld [vmem:[%s474 + $0x28] sm:$0xff]
  %v481 = vld [vmem:[%s474 + $0x30] sm:$0xff]
  %v482 = vld [vmem:[%s474 + $0x38] sm:$0xff]
  %v484 = vsel %vm51, %v473, 0
  %486 = vmatprep.subr.mxu0 0.0
  %487 = vmatpush1.msra.mxu0 %v475
  %488 = vmatprep.subr.mxu0 0.0
  %489 = vmatpush1.msra.mxu0 %v476
  %490 = vmatprep.subr.mxu0 0.0
  %491 = vmatpush1.msra.mxu0 %v477
  %492 = vmatprep.subr.mxu0 0.0
  %493 = vmatpush1.msra.mxu0 %v478
  %494 = vmatprep.subr.mxu0 0.0
  %495 = vmatpush1.msra.mxu0 %v479
  %496 = vmatprep.subr.mxu0 0.0
  %497 = vmatpush1.msra.mxu0 %v480
  %498 = vmatprep.subr.mxu0 0.0
  %499 = vmatpush1.msra.mxu0 %v481
  %500 = vmatprep.subr.mxu0 0.0
  %501 = vmatpush1.msra.mxu0 %v482
  %502 = vmatprep.subr.mxu0 0.0
  %503 = vmatpush1.msra.mxu0 0.0
  %504 = vmatprep.subr.mxu0 0.0
  %505 = vmatpush1.msra.mxu0 0.0
  %506 = vmatprep.subr.mxu0 0.0
  %507 = vmatpush1.msra.mxu0 0.0
  %508 = vmatprep.subr.mxu0 0.0
  %509 = vmatpush1.msra.mxu0 0.0
  %510 = vmatprep.subr.mxu0 0.0
  %511 = vmatpush1.msra.mxu0 0.0
  %512 = vmatprep.subr.mxu0 0.0
  %513 = vmatpush1.msra.mxu0 0.0
  %514 = vmatprep.subr.mxu0 0.0
  %515 = vmatpush1.msra.mxu0 0.0
  %516 = vmatprep.subr.mxu0 0.0
  %517 = vmatpush1.msra.mxu0 0.0
  %518 = vmatprep.subr.mxu0 0.0
  %519 = vmatpush1.msra.mxu0 0.0
  %520 = vmatprep.subr.mxu0 0.0
  %521 = vmatpush1.msra.mxu0 0.0
  %522 = vmatprep.subr.mxu0 0.0
  %523 = vmatpush1.msra.mxu0 0.0
  %524 = vmatprep.subr.mxu0 0.0
  %525 = vmatpush1.msra.mxu0 0.0
  %526 = vmatprep.subr.mxu0 0.0
  %527 = vmatpush1.msra.mxu0 0.0
  %528 = vmatprep.subr.mxu0 0.0
  %529 = vmatpush1.msra.mxu0 0.0
  %530 = vmatprep.subr.mxu0 0.0
  %531 = vmatpush1.msra.mxu0 0.0
  %532 = vmatprep.subr.mxu0 0.0
  %533 = vmatpush1.msra.mxu0 0.0
  %534 = vmatprep.subr.mxu0 0.0
  %535 = vmatpush1.msra.mxu0 0.0
  %536 = vmatprep.subr.mxu0 0.0
  %537 = vmatpush1.msra.mxu0 0.0
  %538 = vmatprep.subr.mxu0 0.0
  %539 = vmatpush1.msra.mxu0 0.0
  %540 = vmatprep.subr.mxu0 0.0
  %541 = vmatpush1.msra.mxu0 0.0
  %542 = vmatprep.subr.mxu0 0.0
  %543 = vmatpush1.msra.mxu0 0.0
  %544 = vmatprep.subr.mxu0 0.0
  %545 = vmatpush1.msra.mxu0 0.0
  %546 = vmatprep.subr.mxu0 0.0
  %547 = vmatpush1.msra.mxu0 0.0
  %548 = vmatprep.subr.mxu0 0.0
  %549 = vmatpush1.msra.mxu0 0.0
  %550 = vmatprep.mubr.f32.mxu0 0.0
  %551 = vmatmul.mubr.f32.gmra.mrb[0].mxu0 %v484
  %v552 = vpop.f32.mrb[0].mxu0
  %v553 = vadd.f32 0.0, %v552
  %v554 = vpop.f32.mrb[0].mxu0
  %555 = vdwg.mxu0
  %v556 = vadd.f32 %v471, %v553
  %s557 = scalar_lea.vmem [#allocation2], 4
  %v558 = vld [vmem:[%s557] ss:$16 sm:$0x3]
  %s559 = scalar_lea.vmem %s5, 256
  %v560 = vld [vmem:[%s559] sm:$0xff]
  %v561 = vld [vmem:[%s559 + $0x8] sm:$0xff]
  %v562 = vld [vmem:[%s559 + $0x10] sm:$0xff]
  %v563 = vld [vmem:[%s559 + $0x18] sm:$0xff]
  %v564 = vld [vmem:[%s559 + $0x20] sm:$0xff]
  %v565 = vld [vmem:[%s559 + $0x28] sm:$0xff]
  %v566 = vld [vmem:[%s559 + $0x30] sm:$0xff]
  %v567 = vld [vmem:[%s559 + $0x38] sm:$0xff]
  %v569 = vsel %vm51, %v558, 0
  %571 = vmatprep.subr.mxu0 0.0
  %572 = vmatpush1.msra.mxu0 %v560
  %573 = vmatprep.subr.mxu0 0.0
  %574 = vmatpush1.msra.mxu0 %v561
  %575 = vmatprep.subr.mxu0 0.0
  %576 = vmatpush1.msra.mxu0 %v562
  %577 = vmatprep.subr.mxu0 0.0
  %578 = vmatpush1.msra.mxu0 %v563
  %579 = vmatprep.subr.mxu0 0.0
  %580 = vmatpush1.msra.mxu0 %v564
  %581 = vmatprep.subr.mxu0 0.0
  %582 = vmatpush1.msra.mxu0 %v565
  %583 = vmatprep.subr.mxu0 0.0
  %584 = vmatpush1.msra.mxu0 %v566
  %585 = vmatprep.subr.mxu0 0.0
  %586 = vmatpush1.msra.mxu0 %v567
  %587 = vmatprep.subr.mxu0 0.0
  %588 = vmatpush1.msra.mxu0 0.0
  %589 = vmatprep.subr.mxu0 0.0
  %590 = vmatpush1.msra.mxu0 0.0
  %591 = vmatprep.subr.mxu0 0.0
  %592 = vmatpush1.msra.mxu0 0.0
  %593 = vmatprep.subr.mxu0 0.0
  %594 = vmatpush1.msra.mxu0 0.0
  %595 = vmatprep.subr.mxu0 0.0
  %596 = vmatpush1.msra.mxu0 0.0
  %597 = vmatprep.subr.mxu0 0.0
  %598 = vmatpush1.msra.mxu0 0.0
  %599 = vmatprep.subr.mxu0 0.0
  %600 = vmatpush1.msra.mxu0 0.0
  %601 = vmatprep.subr.mxu0 0.0
  %602 = vmatpush1.msra.mxu0 0.0
  %603 = vmatprep.subr.mxu0 0.0
  %604 = vmatpush1.msra.mxu0 0.0
  %605 = vmatprep.subr.mxu0 0.0
  %606 = vmatpush1.msra.mxu0 0.0
  %607 = vmatprep.subr.mxu0 0.0
  %608 = vmatpush1.msra.mxu0 0.0
  %609 = vmatprep.subr.mxu0 0.0
  %610 = vmatpush1.msra.mxu0 0.0
  %611 = vmatprep.subr.mxu0 0.0
  %612 = vmatpush1.msra.mxu0 0.0
  %613 = vmatprep.subr.mxu0 0.0
  %614 = vmatpush1.msra.mxu0 0.0
  %615 = vmatprep.subr.mxu0 0.0
  %616 = vmatpush1.msra.mxu0 0.0
  %617 = vmatprep.subr.mxu0 0.0
  %618 = vmatpush1.msra.mxu0 0.0
  %619 = vmatprep.subr.mxu0 0.0
  %620 = vmatpush1.msra.mxu0 0.0
  %621 = vmatprep.subr.mxu0 0.0
  %622 = vmatpush1.msra.mxu0 0.0
  %623 = vmatprep.subr.mxu0 0.0
  %624 = vmatpush1.msra.mxu0 0.0
  %625 = vmatprep.subr.mxu0 0.0
  %626 = vmatpush1.msra.mxu0 0.0
  %627 = vmatprep.subr.mxu0 0.0
  %628 = vmatpush1.msra.mxu0 0.0
  %629 = vmatprep.subr.mxu0 0.0
  %630 = vmatpush1.msra.mxu0 0.0
  %631 = vmatprep.subr.mxu0 0.0
  %632 = vmatpush1.msra.mxu0 0.0
  %633 = vmatprep.subr.mxu0 0.0
  %634 = vmatpush1.msra.mxu0 0.0
  %635 = vmatprep.mubr.f32.mxu0 0.0
  %636 = vmatmul.mubr.f32.gmra.mrb[0].mxu0 %v569
  %v637 = vpop.f32.mrb[0].mxu0
  %v638 = vadd.f32 0.0, %v637
  %v639 = vpop.f32.mrb[0].mxu0
  %640 = vdwg.mxu0
  %v641 = vadd.f32 %v556, %v638
  %s642 = scalar_lea.vmem [#allocation2], 5
  %v643 = vld [vmem:[%s642] ss:$16 sm:$0x3]
  %s644 = scalar_lea.vmem %s5, 320
  %v645 = vld [vmem:[%s644] sm:$0xff]
  %v646 = vld [vmem:[%s644 + $0x8] sm:$0xff]
  %v647 = vld [vmem:[%s644 + $0x10] sm:$0xff]
  %v648 = vld [vmem:[%s644 + $0x18] sm:$0xff]
  %v649 = vld [vmem:[%s644 + $0x20] sm:$0xff]
  %v650 = vld [vmem:[%s644 + $0x28] sm:$0xff]
  %v651 = vld [vmem:[%s644 + $0x30] sm:$0xff]
  %v652 = vld [vmem:[%s644 + $0x38] sm:$0xff]
  %v654 = vsel %vm51, %v643, 0
  %656 = vmatprep.subr.mxu0 0.0
  %657 = vmatpush1.msra.mxu0 %v645
  %658 = vmatprep.subr.mxu0 0.0
  %659 = vmatpush1.msra.mxu0 %v646
  %660 = vmatprep.subr.mxu0 0.0
  %661 = vmatpush1.msra.mxu0 %v647
  %662 = vmatprep.subr.mxu0 0.0
  %663 = vmatpush1.msra.mxu0 %v648
  %664 = vmatprep.subr.mxu0 0.0
  %665 = vmatpush1.msra.mxu0 %v649
  %666 = vmatprep.subr.mxu0 0.0
  %667 = vmatpush1.msra.mxu0 %v650
  %668 = vmatprep.subr.mxu0 0.0
  %669 = vmatpush1.msra.mxu0 %v651
  %670 = vmatprep.subr.mxu0 0.0
  %671 = vmatpush1.msra.mxu0 %v652
  %672 = vmatprep.subr.mxu0 0.0
  %673 = vmatpush1.msra.mxu0 0.0
  %674 = vmatprep.subr.mxu0 0.0
  %675 = vmatpush1.msra.mxu0 0.0
  %676 = vmatprep.subr.mxu0 0.0
  %677 = vmatpush1.msra.mxu0 0.0
  %678 = vmatprep.subr.mxu0 0.0
  %679 = vmatpush1.msra.mxu0 0.0
  %680 = vmatprep.subr.mxu0 0.0
  %681 = vmatpush1.msra.mxu0 0.0
  %682 = vmatprep.subr.mxu0 0.0
  %683 = vmatpush1.msra.mxu0 0.0
  %684 = vmatprep.subr.mxu0 0.0
  %685 = vmatpush1.msra.mxu0 0.0
  %686 = vmatprep.subr.mxu0 0.0
  %687 = vmatpush1.msra.mxu0 0.0
  %688 = vmatprep.subr.mxu0 0.0
  %689 = vmatpush1.msra.mxu0 0.0
  %690 = vmatprep.subr.mxu0 0.0
  %691 = vmatpush1.msra.mxu0 0.0
  %692 = vmatprep.subr.mxu0 0.0
  %693 = vmatpush1.msra.mxu0 0.0
  %694 = vmatprep.subr.mxu0 0.0
  %695 = vmatpush1.msra.mxu0 0.0
  %696 = vmatprep.subr.mxu0 0.0
  %697 = vmatpush1.msra.mxu0 0.0
  %698 = vmatprep.subr.mxu0 0.0
  %699 = vmatpush1.msra.mxu0 0.0
  %700 = vmatprep.subr.mxu0 0.0
  %701 = vmatpush1.msra.mxu0 0.0
  %702 = vmatprep.subr.mxu0 0.0
  %703 = vmatpush1.msra.mxu0 0.0
  %704 = vmatprep.subr.mxu0 0.0
  %705 = vmatpush1.msra.mxu0 0.0
  %706 = vmatprep.subr.mxu0 0.0
  %707 = vmatpush1.msra.mxu0 0.0
  %708 = vmatprep.subr.mxu0 0.0
  %709 = vmatpush1.msra.mxu0 0.0
  %710 = vmatprep.subr.mxu0 0.0
  %711 = vmatpush1.msra.mxu0 0.0
  %712 = vmatprep.subr.mxu0 0.0
  %713 = vmatpush1.msra.mxu0 0.0
  %714 = vmatprep.subr.mxu0 0.0
  %715 = vmatpush1.msra.mxu0 0.0
  %716 = vmatprep.subr.mxu0 0.0
  %717 = vmatpush1.msra.mxu0 0.0
  %718 = vmatprep.subr.mxu0 0.0
  %719 = vmatpush1.msra.mxu0 0.0
  %720 = vmatprep.mubr.f32.mxu0 0.0
  %721 = vmatmul.mubr.f32.gmra.mrb[0].mxu0 %v654
  %v722 = vpop.f32.mrb[0].mxu0
  %v723 = vadd.f32 0.0, %v722
  %v724 = vpop.f32.mrb[0].mxu0
  %725 = vdwg.mxu0
  %v726 = vadd.f32 %v641, %v723
  %s727 = scalar_lea.vmem [#allocation2], 6
  %v728 = vld [vmem:[%s727] ss:$16 sm:$0x3]
  %s729 = scalar_lea.vmem %s5, 384
  %v730 = vld [vmem:[%s729] sm:$0xff]
  %v731 = vld [vmem:[%s729 + $0x8] sm:$0xff]
  %v732 = vld [vmem:[%s729 + $0x10] sm:$0xff]
  %v733 = vld [vmem:[%s729 + $0x18] sm:$0xff]
  %v734 = vld [vmem:[%s729 + $0x20] sm:$0xff]
  %v735 = vld [vmem:[%s729 + $0x28] sm:$0xff]
  %v736 = vld [vmem:[%s729 + $0x30] sm:$0xff]
  %v737 = vld [vmem:[%s729 + $0x38] sm:$0xff]
  %v739 = vsel %vm51, %v728, 0
  %741 = vmatprep.subr.mxu0 0.0
  %742 = vmatpush1.msra.mxu0 %v730
  %743 = vmatprep.subr.mxu0 0.0
  %744 = vmatpush1.msra.mxu0 %v731
  %745 = vmatprep.subr.mxu0 0.0
  %746 = vmatpush1.msra.mxu0 %v732
  %747 = vmatprep.subr.mxu0 0.0
  %748 = vmatpush1.msra.mxu0 %v733
  %749 = vmatprep.subr.mxu0 0.0
  %750 = vmatpush1.msra.mxu0 %v734
  %751 = vmatprep.subr.mxu0 0.0
  %752 = vmatpush1.msra.mxu0 %v735
  %753 = vmatprep.subr.mxu0 0.0
  %754 = vmatpush1.msra.mxu0 %v736
  %755 = vmatprep.subr.mxu0 0.0
  %756 = vmatpush1.msra.mxu0 %v737
  %757 = vmatprep.subr.mxu0 0.0
  %758 = vmatpush1.msra.mxu0 0.0
  %759 = vmatprep.subr.mxu0 0.0
  %760 = vmatpush1.msra.mxu0 0.0
  %761 = vmatprep.subr.mxu0 0.0
  %762 = vmatpush1.msra.mxu0 0.0
  %763 = vmatprep.subr.mxu0 0.0
  %764 = vmatpush1.msra.mxu0 0.0
  %765 = vmatprep.subr.mxu0 0.0
  %766 = vmatpush1.msra.mxu0 0.0
  %767 = vmatprep.subr.mxu0 0.0
  %768 = vmatpush1.msra.mxu0 0.0
  %769 = vmatprep.subr.mxu0 0.0
  %770 = vmatpush1.msra.mxu0 0.0
  %771 = vmatprep.subr.mxu0 0.0
  %772 = vmatpush1.msra.mxu0 0.0
  %773 = vmatprep.subr.mxu0 0.0
  %774 = vmatpush1.msra.mxu0 0.0
  %775 = vmatprep.subr.mxu0 0.0
  %776 = vmatpush1.msra.mxu0 0.0
  %777 = vmatprep.subr.mxu0 0.0
  %778 = vmatpush1.msra.mxu0 0.0
  %779 = vmatprep.subr.mxu0 0.0
  %780 = vmatpush1.msra.mxu0 0.0
  %781 = vmatprep.subr.mxu0 0.0
  %782 = vmatpush1.msra.mxu0 0.0
  %783 = vmatprep.subr.mxu0 0.0
  %784 = vmatpush1.msra.mxu0 0.0
  %785 = vmatprep.subr.mxu0 0.0
  %786 = vmatpush1.msra.mxu0 0.0
  %787 = vmatprep.subr.mxu0 0.0
  %788 = vmatpush1.msra.mxu0 0.0
  %789 = vmatprep.subr.mxu0 0.0
  %790 = vmatpush1.msra.mxu0 0.0
  %791 = vmatprep.subr.mxu0 0.0
  %792 = vmatpush1.msra.mxu0 0.0
  %793 = vmatprep.subr.mxu0 0.0
  %794 = vmatpush1.msra.mxu0 0.0
  %795 = vmatprep.subr.mxu0 0.0
  %796 = vmatpush1.msra.mxu0 0.0
  %797 = vmatprep.subr.mxu0 0.0
  %798 = vmatpush1.msra.mxu0 0.0
  %799 = vmatprep.subr.mxu0 0.0
  %800 = vmatpush1.msra.mxu0 0.0
  %801 = vmatprep.subr.mxu0 0.0
  %802 = vmatpush1.msra.mxu0 0.0
  %803 = vmatprep.subr.mxu0 0.0
  %804 = vmatpush1.msra.mxu0 0.0
  %805 = vmatprep.mubr.f32.mxu0 0.0
  %806 = vmatmul.mubr.f32.gmra.mrb[0].mxu0 %v739
  %v807 = vpop.f32.mrb[0].mxu0
  %v808 = vadd.f32 0.0, %v807
  %v809 = vpop.f32.mrb[0].mxu0
  %810 = vdwg.mxu0
  %v811 = vadd.f32 %v726, %v808
  %s812 = scalar_lea.vmem [#allocation2], 7
  %v813 = vld [vmem:[%s812] ss:$16 sm:$0x3]
  %s814 = scalar_lea.vmem %s5, 448
  %v815 = vld [vmem:[%s814] sm:$0xff]
  %v816 = vld [vmem:[%s814 + $0x8] sm:$0xff]
  %v817 = vld [vmem:[%s814 + $0x10] sm:$0xff]
  %v818 = vld [vmem:[%s814 + $0x18] sm:$0xff]
  %v819 = vld [vmem:[%s814 + $0x20] sm:$0xff]
  %v820 = vld [vmem:[%s814 + $0x28] sm:$0xff]
  %v821 = vld [vmem:[%s814 + $0x30] sm:$0xff]
  %v822 = vld [vmem:[%s814 + $0x38] sm:$0xff]
  %v824 = vsel %vm51, %v813, 0
  %826 = vmatprep.subr.mxu0 0.0
  %827 = vmatpush1.msra.mxu0 %v815
  %828 = vmatprep.subr.mxu0 0.0
  %829 = vmatpush1.msra.mxu0 %v816
  %830 = vmatprep.subr.mxu0 0.0
  %831 = vmatpush1.msra.mxu0 %v817
  %832 = vmatprep.subr.mxu0 0.0
  %833 = vmatpush1.msra.mxu0 %v818
  %834 = vmatprep.subr.mxu0 0.0
  %835 = vmatpush1.msra.mxu0 %v819
  %836 = vmatprep.subr.mxu0 0.0
  %837 = vmatpush1.msra.mxu0 %v820
  %838 = vmatprep.subr.mxu0 0.0
  %839 = vmatpush1.msra.mxu0 %v821
  %840 = vmatprep.subr.mxu0 0.0
  %841 = vmatpush1.msra.mxu0 %v822
  %842 = vmatprep.subr.mxu0 0.0
  %843 = vmatpush1.msra.mxu0 0.0
  %844 = vmatprep.subr.mxu0 0.0
  %845 = vmatpush1.msra.mxu0 0.0
  %846 = vmatprep.subr.mxu0 0.0
  %847 = vmatpush1.msra.mxu0 0.0
  %848 = vmatprep.subr.mxu0 0.0
  %849 = vmatpush1.msra.mxu0 0.0
  %850 = vmatprep.subr.mxu0 0.0
  %851 = vmatpush1.msra.mxu0 0.0
  %852 = vmatprep.subr.mxu0 0.0
  %853 = vmatpush1.msra.mxu0 0.0
  %854 = vmatprep.subr.mxu0 0.0
  %855 = vmatpush1.msra.mxu0 0.0
  %856 = vmatprep.subr.mxu0 0.0
  %857 = vmatpush1.msra.mxu0 0.0
  %858 = vmatprep.subr.mxu0 0.0
  %859 = vmatpush1.msra.mxu0 0.0
  %860 = vmatprep.subr.mxu0 0.0
  %861 = vmatpush1.msra.mxu0 0.0
  %862 = vmatprep.subr.mxu0 0.0
  %863 = vmatpush1.msra.mxu0 0.0
  %864 = vmatprep.subr.mxu0 0.0
  %865 = vmatpush1.msra.mxu0 0.0
  %866 = vmatprep.subr.mxu0 0.0
  %867 = vmatpush1.msra.mxu0 0.0
  %868 = vmatprep.subr.mxu0 0.0
  %869 = vmatpush1.msra.mxu0 0.0
  %870 = vmatprep.subr.mxu0 0.0
  %871 = vmatpush1.msra.mxu0 0.0
  %872 = vmatprep.subr.mxu0 0.0
  %873 = vmatpush1.msra.mxu0 0.0
  %874 = vmatprep.subr.mxu0 0.0
  %875 = vmatpush1.msra.mxu0 0.0
  %876 = vmatprep.subr.mxu0 0.0
  %877 = vmatpush1.msra.mxu0 0.0
  %878 = vmatprep.subr.mxu0 0.0
  %879 = vmatpush1.msra.mxu0 0.0
  %880 = vmatprep.subr.mxu0 0.0
  %881 = vmatpush1.msra.mxu0 0.0
  %882 = vmatprep.subr.mxu0 0.0
  %883 = vmatpush1.msra.mxu0 0.0
  %884 = vmatprep.subr.mxu0 0.0
  %885 = vmatpush1.msra.mxu0 0.0
  %886 = vmatprep.subr.mxu0 0.0
  %887 = vmatpush1.msra.mxu0 0.0
  %888 = vmatprep.subr.mxu0 0.0
  %889 = vmatpush1.msra.mxu0 0.0
  %890 = vmatprep.mubr.f32.mxu0 0.0
  %891 = vmatmul.mubr.f32.gmra.mrb[0].mxu0 %v824
  %v892 = vpop.f32.mrb[0].mxu0
  %v893 = vadd.f32 0.0, %v892
  %v894 = vpop.f32.mrb[0].mxu0
  %895 = vdwg.mxu0
  %v896 = vadd.f32 %v811, %v893
  %s897 = scalar_lea.vmem [#allocation2], 8
  %v898 = vld [vmem:[%s897] ss:$16 sm:$0x3]
  %s899 = scalar_lea.vmem %s5, 512
  %v900 = vld [vmem:[%s899] sm:$0xff]
  %v901 = vld [vmem:[%s899 + $0x8] sm:$0xff]
  %v902 = vld [vmem:[%s899 + $0x10] sm:$0xff]
  %v903 = vld [vmem:[%s899 + $0x18] sm:$0xff]
  %v904 = vld [vmem:[%s899 + $0x20] sm:$0xff]
  %v905 = vld [vmem:[%s899 + $0x28] sm:$0xff]
  %v906 = vld [vmem:[%s899 + $0x30] sm:$0xff]
  %v907 = vld [vmem:[%s899 + $0x38] sm:$0xff]
  %v909 = vsel %vm51, %v898, 0
  %911 = vmatprep.subr.mxu0 0.0
  %912 = vmatpush1.msra.mxu0 %v900
  %913 = vmatprep.subr.mxu0 0.0
  %914 = vmatpush1.msra.mxu0 %v901
  %915 = vmatprep.subr.mxu0 0.0
  %916 = vmatpush1.msra.mxu0 %v902
  %917 = vmatprep.subr.mxu0 0.0
  %918 = vmatpush1.msra.mxu0 %v903
  %919 = vmatprep.subr.mxu0 0.0
  %920 = vmatpush1.msra.mxu0 %v904
  %921 = vmatprep.subr.mxu0 0.0
  %922 = vmatpush1.msra.mxu0 %v905
  %923 = vmatprep.subr.mxu0 0.0
  %924 = vmatpush1.msra.mxu0 %v906
  %925 = vmatprep.subr.mxu0 0.0
  %926 = vmatpush1.msra.mxu0 %v907
  %927 = vmatprep.subr.mxu0 0.0
  %928 = vmatpush1.msra.mxu0 0.0
  %929 = vmatprep.subr.mxu0 0.0
  %930 = vmatpush1.msra.mxu0 0.0
  %931 = vmatprep.subr.mxu0 0.0
  %932 = vmatpush1.msra.mxu0 0.0
  %933 = vmatprep.subr.mxu0 0.0
  %934 = vmatpush1.msra.mxu0 0.0
  %935 = vmatprep.subr.mxu0 0.0
  %936 = vmatpush1.msra.mxu0 0.0
  %937 = vmatprep.subr.mxu0 0.0
  %938 = vmatpush1.msra.mxu0 0.0
  %939 = vmatprep.subr.mxu0 0.0
  %940 = vmatpush1.msra.mxu0 0.0
  %941 = vmatprep.subr.mxu0 0.0
  %942 = vmatpush1.msra.mxu0 0.0
  %943 = vmatprep.subr.mxu0 0.0
  %944 = vmatpush1.msra.mxu0 0.0
  %945 = vmatprep.subr.mxu0 0.0
  %946 = vmatpush1.msra.mxu0 0.0
  %947 = vmatprep.subr.mxu0 0.0
  %948 = vmatpush1.msra.mxu0 0.0
  %949 = vmatprep.subr.mxu0 0.0
  %950 = vmatpush1.msra.mxu0 0.0
  %951 = vmatprep.subr.mxu0 0.0
  %952 = vmatpush1.msra.mxu0 0.0
  %953 = vmatprep.subr.mxu0 0.0
  %954 = vmatpush1.msra.mxu0 0.0
  %955 = vmatprep.subr.mxu0 0.0
  %956 = vmatpush1.msra.mxu0 0.0
  %957 = vmatprep.subr.mxu0 0.0
  %958 = vmatpush1.msra.mxu0 0.0
  %959 = vmatprep.subr.mxu0 0.0
  %960 = vmatpush1.msra.mxu0 0.0
  %961 = vmatprep.subr.mxu0 0.0
  %962 = vmatpush1.msra.mxu0 0.0
  %963 = vmatprep.subr.mxu0 0.0
  %964 = vmatpush1.msra.mxu0 0.0
  %965 = vmatprep.subr.mxu0 0.0
  %966 = vmatpush1.msra.mxu0 0.0
  %967 = vmatprep.subr.mxu0 0.0
  %968 = vmatpush1.msra.mxu0 0.0
  %969 = vmatprep.subr.mxu0 0.0
  %970 = vmatpush1.msra.mxu0 0.0
  %971 = vmatprep.subr.mxu0 0.0
  %972 = vmatpush1.msra.mxu0 0.0
  %973 = vmatprep.subr.mxu0 0.0
  %974 = vmatpush1.msra.mxu0 0.0
  %975 = vmatprep.mubr.f32.mxu0 0.0
  %976 = vmatmul.mubr.f32.gmra.mrb[0].mxu0 %v909
  %v977 = vpop.f32.mrb[0].mxu0
  %v978 = vadd.f32 0.0, %v977
  %v979 = vpop.f32.mrb[0].mxu0
  %980 = vdwg.mxu0
  %v981 = vadd.f32 %v896, %v978
  %s982 = scalar_lea.vmem [#allocation2], 9
  %v983 = vld [vmem:[%s982] ss:$16 sm:$0x3]
  %s984 = scalar_lea.vmem %s5, 576
  %v985 = vld [vmem:[%s984] sm:$0xff]
  %v986 = vld [vmem:[%s984 + $0x8] sm:$0xff]
  %v987 = vld [vmem:[%s984 + $0x10] sm:$0xff]
  %v988 = vld [vmem:[%s984 + $0x18] sm:$0xff]
  %v989 = vld [vmem:[%s984 + $0x20] sm:$0xff]
  %v990 = vld [vmem:[%s984 + $0x28] sm:$0xff]
  %v991 = vld [vmem:[%s984 + $0x30] sm:$0xff]
  %v992 = vld [vmem:[%s984 + $0x38] sm:$0xff]
  %v994 = vsel %vm51, %v983, 0
  %996 = vmatprep.subr.mxu0 0.0
  %997 = vmatpush1.msra.mxu0 %v985
  %998 = vmatprep.subr.mxu0 0.0
  %999 = vmatpush1.msra.mxu0 %v986
  %1000 = vmatprep.subr.mxu0 0.0
  %1001 = vmatpush1.msra.mxu0 %v987
  %1002 = vmatprep.subr.mxu0 0.0
  %1003 = vmatpush1.msra.mxu0 %v988
  %1004 = vmatprep.subr.mxu0 0.0
  %1005 = vmatpush1.msra.mxu0 %v989
  %1006 = vmatprep.subr.mxu0 0.0
  %1007 = vmatpush1.msra.mxu0 %v990
  %1008 = vmatprep.subr.mxu0 0.0
  %1009 = vmatpush1.msra.mxu0 %v991
  %1010 = vmatprep.subr.mxu0 0.0
  %1011 = vmatpush1.msra.mxu0 %v992
  %1012 = vmatprep.subr.mxu0 0.0
  %1013 = vmatpush1.msra.mxu0 0.0
  %1014 = vmatprep.subr.mxu0 0.0
  %1015 = vmatpush1.msra.mxu0 0.0
  %1016 = vmatprep.subr.mxu0 0.0
  %1017 = vmatpush1.msra.mxu0 0.0
  %1018 = vmatprep.subr.mxu0 0.0
  %1019 = vmatpush1.msra.mxu0 0.0
  %1020 = vmatprep.subr.mxu0 0.0
  %1021 = vmatpush1.msra.mxu0 0.0
  %1022 = vmatprep.subr.mxu0 0.0
  %1023 = vmatpush1.msra.mxu0 0.0
  %1024 = vmatprep.subr.mxu0 0.0
  %1025 = vmatpush1.msra.mxu0 0.0
  %1026 = vmatprep.subr.mxu0 0.0
  %1027 = vmatpush1.msra.mxu0 0.0
  %1028 = vmatprep.subr.mxu0 0.0
  %1029 = vmatpush1.msra.mxu0 0.0
  %1030 = vmatprep.subr.mxu0 0.0
  %1031 = vmatpush1.msra.mxu0 0.0
  %1032 = vmatprep.subr.mxu0 0.0
  %1033 = vmatpush1.msra.mxu0 0.0
  %1034 = vmatprep.subr.mxu0 0.0
  %1035 = vmatpush1.msra.mxu0 0.0
  %1036 = vmatprep.subr.mxu0 0.0
  %1037 = vmatpush1.msra.mxu0 0.0
  %1038 = vmatprep.subr.mxu0 0.0
  %1039 = vmatpush1.msra.mxu0 0.0
  %1040 = vmatprep.subr.mxu0 0.0
  %1041 = vmatpush1.msra.mxu0 0.0
  %1042 = vmatprep.subr.mxu0 0.0
  %1043 = vmatpush1.msra.mxu0 0.0
  %1044 = vmatprep.subr.mxu0 0.0
  %1045 = vmatpush1.msra.mxu0 0.0
  %1046 = vmatprep.subr.mxu0 0.0
  %1047 = vmatpush1.msra.mxu0 0.0
  %1048 = vmatprep.subr.mxu0 0.0
  %1049 = vmatpush1.msra.mxu0 0.0
  %1050 = vmatprep.subr.mxu0 0.0
  %1051 = vmatpush1.msra.mxu0 0.0
  %1052 = vmatprep.subr.mxu0 0.0
  %1053 = vmatpush1.msra.mxu0 0.0
  %1054 = vmatprep.subr.mxu0 0.0
  %1055 = vmatpush1.msra.mxu0 0.0
  %1056 = vmatprep.subr.mxu0 0.0
  %1057 = vmatpush1.msra.mxu0 0.0
  %1058 = vmatprep.subr.mxu0 0.0
  %1059 = vmatpush1.msra.mxu0 0.0
  %1060 = vmatprep.mubr.f32.mxu0 0.0
  %1061 = vmatmul.mubr.f32.gmra.mrb[0].mxu0 %v994
  %v1062 = vpop.f32.mrb[0].mxu0
  %v1063 = vadd.f32 0.0, %v1062
  %v1064 = vpop.f32.mrb[0].mxu0
  %1065 = vdwg.mxu0
  %v1066 = vadd.f32 %v981, %v1063
  %s1067 = scalar_lea.vmem [#allocation2], 10
  %v1068 = vld [vmem:[%s1067] ss:$16 sm:$0x3]
  %s1069 = scalar_lea.vmem %s5, 640
  %v1070 = vld [vmem:[%s1069] sm:$0xff]
  %v1071 = vld [vmem:[%s1069 + $0x8] sm:$0xff]
  %v1072 = vld [vmem:[%s1069 + $0x10] sm:$0xff]
  %v1073 = vld [vmem:[%s1069 + $0x18] sm:$0xff]
  %v1074 = vld [vmem:[%s1069 + $0x20] sm:$0xff]
  %v1075 = vld [vmem:[%s1069 + $0x28] sm:$0xff]
  %v1076 = vld [vmem:[%s1069 + $0x30] sm:$0xff]
  %v1077 = vld [vmem:[%s1069 + $0x38] sm:$0xff]
  %v1079 = vsel %vm51, %v1068, 0
  %1081 = vmatprep.subr.mxu0 0.0
  %1082 = vmatpush1.msra.mxu0 %v1070
  %1083 = vmatprep.subr.mxu0 0.0
  %1084 = vmatpush1.msra.mxu0 %v1071
  %1085 = vmatprep.subr.mxu0 0.0
  %1086 = vmatpush1.msra.mxu0 %v1072
  %1087 = vmatprep.subr.mxu0 0.0
  %1088 = vmatpush1.msra.mxu0 %v1073
  %1089 = vmatprep.subr.mxu0 0.0
  %1090 = vmatpush1.msra.mxu0 %v1074
  %1091 = vmatprep.subr.mxu0 0.0
  %1092 = vmatpush1.msra.mxu0 %v1075
  %1093 = vmatprep.subr.mxu0 0.0
  %1094 = vmatpush1.msra.mxu0 %v1076
  %1095 = vmatprep.subr.mxu0 0.0
  %1096 = vmatpush1.msra.mxu0 %v1077
  %1097 = vmatprep.subr.mxu0 0.0
  %1098 = vmatpush1.msra.mxu0 0.0
  %1099 = vmatprep.subr.mxu0 0.0
  %1100 = vmatpush1.msra.mxu0 0.0
  %1101 = vmatprep.subr.mxu0 0.0
  %1102 = vmatpush1.msra.mxu0 0.0
  %1103 = vmatprep.subr.mxu0 0.0
  %1104 = vmatpush1.msra.mxu0 0.0
  %1105 = vmatprep.subr.mxu0 0.0
  %1106 = vmatpush1.msra.mxu0 0.0
  %1107 = vmatprep.subr.mxu0 0.0
  %1108 = vmatpush1.msra.mxu0 0.0
  %1109 = vmatprep.subr.mxu0 0.0
  %1110 = vmatpush1.msra.mxu0 0.0
  %1111 = vmatprep.subr.mxu0 0.0
  %1112 = vmatpush1.msra.mxu0 0.0
  %1113 = vmatprep.subr.mxu0 0.0
  %1114 = vmatpush1.msra.mxu0 0.0
  %1115 = vmatprep.subr.mxu0 0.0
  %1116 = vmatpush1.msra.mxu0 0.0
  %1117 = vmatprep.subr.mxu0 0.0
  %1118 = vmatpush1.msra.mxu0 0.0
  %1119 = vmatprep.subr.mxu0 0.0
  %1120 = vmatpush1.msra.mxu0 0.0
  %1121 = vmatprep.subr.mxu0 0.0
  %1122 = vmatpush1.msra.mxu0 0.0
  %1123 = vmatprep.subr.mxu0 0.0
  %1124 = vmatpush1.msra.mxu0 0.0
  %1125 = vmatprep.subr.mxu0 0.0
  %1126 = vmatpush1.msra.mxu0 0.0
  %1127 = vmatprep.subr.mxu0 0.0
  %1128 = vmatpush1.msra.mxu0 0.0
  %1129 = vmatprep.subr.mxu0 0.0
  %1130 = vmatpush1.msra.mxu0 0.0
  %1131 = vmatprep.subr.mxu0 0.0
  %1132 = vmatpush1.msra.mxu0 0.0
  %1133 = vmatprep.subr.mxu0 0.0
  %1134 = vmatpush1.msra.mxu0 0.0
  %1135 = vmatprep.subr.mxu0 0.0
  %1136 = vmatpush1.msra.mxu0 0.0
  %1137 = vmatprep.subr.mxu0 0.0
  %1138 = vmatpush1.msra.mxu0 0.0
  %1139 = vmatprep.subr.mxu0 0.0
  %1140 = vmatpush1.msra.mxu0 0.0
  %1141 = vmatprep.subr.mxu0 0.0
  %1142 = vmatpush1.msra.mxu0 0.0
  %1143 = vmatprep.subr.mxu0 0.0
  %1144 = vmatpush1.msra.mxu0 0.0
  %1145 = vmatprep.mubr.f32.mxu0 0.0
  %1146 = vmatmul.mubr.f32.gmra.mrb[0].mxu0 %v1079
  %v1147 = vpop.f32.mrb[0].mxu0
  %v1148 = vadd.f32 0.0, %v1147
  %v1149 = vpop.f32.mrb[0].mxu0
  %1150 = vdwg.mxu0
  %v1151 = vadd.f32 %v1066, %v1148
  %s1152 = scalar_lea.vmem [#allocation2], 11
  %v1153 = vld [vmem:[%s1152] ss:$16 sm:$0x3]
  %s1154 = scalar_lea.vmem %s5, 704
  %v1155 = vld [vmem:[%s1154] sm:$0xff]
  %v1156 = vld [vmem:[%s1154 + $0x8] sm:$0xff]
  %v1157 = vld [vmem:[%s1154 + $0x10] sm:$0xff]
  %v1158 = vld [vmem:[%s1154 + $0x18] sm:$0xff]
  %v1159 = vld [vmem:[%s1154 + $0x20] sm:$0xff]
  %v1160 = vld [vmem:[%s1154 + $0x28] sm:$0xff]
  %v1161 = vld [vmem:[%s1154 + $0x30] sm:$0xff]
  %v1162 = vld [vmem:[%s1154 + $0x38] sm:$0xff]
  %v1164 = vsel %vm51, %v1153, 0
  %1166 = vmatprep.subr.mxu0 0.0
  %1167 = vmatpush1.msra.mxu0 %v1155
  %1168 = vmatprep.subr.mxu0 0.0
  %1169 = vmatpush1.msra.mxu0 %v1156
  %1170 = vmatprep.subr.mxu0 0.0
  %1171 = vmatpush1.msra.mxu0 %v1157
  %1172 = vmatprep.subr.mxu0 0.0
  %1173 = vmatpush1.msra.mxu0 %v1158
  %1174 = vmatprep.subr.mxu0 0.0
  %1175 = vmatpush1.msra.mxu0 %v1159
  %1176 = vmatprep.subr.mxu0 0.0
  %1177 = vmatpush1.msra.mxu0 %v1160
  %1178 = vmatprep.subr.mxu0 0.0
  %1179 = vmatpush1.msra.mxu0 %v1161
  %1180 = vmatprep.subr.mxu0 0.0
  %1181 = vmatpush1.msra.mxu0 %v1162
  %1182 = vmatprep.subr.mxu0 0.0
  %1183 = vmatpush1.msra.mxu0 0.0
  %1184 = vmatprep.subr.mxu0 0.0
  %1185 = vmatpush1.msra.mxu0 0.0
  %1186 = vmatprep.subr.mxu0 0.0
  %1187 = vmatpush1.msra.mxu0 0.0
  %1188 = vmatprep.subr.mxu0 0.0
  %1189 = vmatpush1.msra.mxu0 0.0
  %1190 = vmatprep.subr.mxu0 0.0
  %1191 = vmatpush1.msra.mxu0 0.0
  %1192 = vmatprep.subr.mxu0 0.0
  %1193 = vmatpush1.msra.mxu0 0.0
  %1194 = vmatprep.subr.mxu0 0.0
  %1195 = vmatpush1.msra.mxu0 0.0
  %1196 = vmatprep.subr.mxu0 0.0
  %1197 = vmatpush1.msra.mxu0 0.0
  %1198 = vmatprep.subr.mxu0 0.0
  %1199 = vmatpush1.msra.mxu0 0.0
  %1200 = vmatprep.subr.mxu0 0.0
  %1201 = vmatpush1.msra.mxu0 0.0
  %1202 = vmatprep.subr.mxu0 0.0
  %1203 = vmatpush1.msra.mxu0 0.0
  %1204 = vmatprep.subr.mxu0 0.0
  %1205 = vmatpush1.msra.mxu0 0.0
  %1206 = vmatprep.subr.mxu0 0.0
  %1207 = vmatpush1.msra.mxu0 0.0
  %1208 = vmatprep.subr.mxu0 0.0
  %1209 = vmatpush1.msra.mxu0 0.0
  %1210 = vmatprep.subr.mxu0 0.0
  %1211 = vmatpush1.msra.mxu0 0.0
  %1212 = vmatprep.subr.mxu0 0.0
  %1213 = vmatpush1.msra.mxu0 0.0
  %1214 = vmatprep.subr.mxu0 0.0
  %1215 = vmatpush1.msra.mxu0 0.0
  %1216 = vmatprep.subr.mxu0 0.0
  %1217 = vmatpush1.msra.mxu0 0.0
  %1218 = vmatprep.subr.mxu0 0.0
  %1219 = vmatpush1.msra.mxu0 0.0
  %1220 = vmatprep.subr.mxu0 0.0
  %1221 = vmatpush1.msra.mxu0 0.0
  %1222 = vmatprep.subr.mxu0 0.0
  %1223 = vmatpush1.msra.mxu0 0.0
  %1224 = vmatprep.subr.mxu0 0.0
  %1225 = vmatpush1.msra.mxu0 0.0
  %1226 = vmatprep.subr.mxu0 0.0
  %1227 = vmatpush1.msra.mxu0 0.0
  %1228 = vmatprep.subr.mxu0 0.0
  %1229 = vmatpush1.msra.mxu0 0.0
  %1230 = vmatprep.mubr.f32.mxu0 0.0
  %1231 = vmatmul.mubr.f32.gmra.mrb[0].mxu0 %v1164
  %v1232 = vpop.f32.mrb[0].mxu0
  %v1233 = vadd.f32 0.0, %v1232
  %v1234 = vpop.f32.mrb[0].mxu0
  %1235 = vdwg.mxu0
  %v1236 = vadd.f32 %v1151, %v1233
  %s1237 = scalar_lea.vmem [#allocation2], 12
  %v1238 = vld [vmem:[%s1237] ss:$16 sm:$0x3]
  %s1239 = scalar_lea.vmem %s5, 768
  %v1240 = vld [vmem:[%s1239] sm:$0xff]
  %v1241 = vld [vmem:[%s1239 + $0x8] sm:$0xff]
  %v1242 = vld [vmem:[%s1239 + $0x10] sm:$0xff]
  %v1243 = vld [vmem:[%s1239 + $0x18] sm:$0xff]
  %v1244 = vld [vmem:[%s1239 + $0x20] sm:$0xff]
  %v1245 = vld [vmem:[%s1239 + $0x28] sm:$0xff]
  %v1246 = vld [vmem:[%s1239 + $0x30] sm:$0xff]
  %v1247 = vld [vmem:[%s1239 + $0x38] sm:$0xff]
  %v1249 = vsel %vm51, %v1238, 0
  %1251 = vmatprep.subr.mxu0 0.0
  %1252 = vmatpush1.msra.mxu0 %v1240
  %1253 = vmatprep.subr.mxu0 0.0
  %1254 = vmatpush1.msra.mxu0 %v1241
  %1255 = vmatprep.subr.mxu0 0.0
  %1256 = vmatpush1.msra.mxu0 %v1242
  %1257 = vmatprep.subr.mxu0 0.0
  %1258 = vmatpush1.msra.mxu0 %v1243
  %1259 = vmatprep.subr.mxu0 0.0
  %1260 = vmatpush1.msra.mxu0 %v1244
  %1261 = vmatprep.subr.mxu0 0.0
  %1262 = vmatpush1.msra.mxu0 %v1245
  %1263 = vmatprep.subr.mxu0 0.0
  %1264 = vmatpush1.msra.mxu0 %v1246
  %1265 = vmatprep.subr.mxu0 0.0
  %1266 = vmatpush1.msra.mxu0 %v1247
  %1267 = vmatprep.subr.mxu0 0.0
  %1268 = vmatpush1.msra.mxu0 0.0
  %1269 = vmatprep.subr.mxu0 0.0
  %1270 = vmatpush1.msra.mxu0 0.0
  %1271 = vmatprep.subr.mxu0 0.0
  %1272 = vmatpush1.msra.mxu0 0.0
  %1273 = vmatprep.subr.mxu0 0.0
  %1274 = vmatpush1.msra.mxu0 0.0
  %1275 = vmatprep.subr.mxu0 0.0
  %1276 = vmatpush1.msra.mxu0 0.0
  %1277 = vmatprep.subr.mxu0 0.0
  %1278 = vmatpush1.msra.mxu0 0.0
  %1279 = vmatprep.subr.mxu0 0.0
  %1280 = vmatpush1.msra.mxu0 0.0
  %1281 = vmatprep.subr.mxu0 0.0
  %1282 = vmatpush1.msra.mxu0 0.0
  %1283 = vmatprep.subr.mxu0 0.0
  %1284 = vmatpush1.msra.mxu0 0.0
  %1285 = vmatprep.subr.mxu0 0.0
  %1286 = vmatpush1.msra.mxu0 0.0
  %1287 = vmatprep.subr.mxu0 0.0
  %1288 = vmatpush1.msra.mxu0 0.0
  %1289 = vmatprep.subr.mxu0 0.0
  %1290 = vmatpush1.msra.mxu0 0.0
  %1291 = vmatprep.subr.mxu0 0.0
  %1292 = vmatpush1.msra.mxu0 0.0
  %1293 = vmatprep.subr.mxu0 0.0
  %1294 = vmatpush1.msra.mxu0 0.0
  %1295 = vmatprep.subr.mxu0 0.0
  %1296 = vmatpush1.msra.mxu0 0.0
  %1297 = vmatprep.subr.mxu0 0.0
  %1298 = vmatpush1.msra.mxu0 0.0
  %1299 = vmatprep.subr.mxu0 0.0
  %1300 = vmatpush1.msra.mxu0 0.0
  %1301 = vmatprep.subr.mxu0 0.0
  %1302 = vmatpush1.msra.mxu0 0.0
  %1303 = vmatprep.subr.mxu0 0.0
  %1304 = vmatpush1.msra.mxu0 0.0
  %1305 = vmatprep.subr.mxu0 0.0
  %1306 = vmatpush1.msra.mxu0 0.0
  %1307 = vmatprep.subr.mxu0 0.0
  %1308 = vmatpush1.msra.mxu0 0.0
  %1309 = vmatprep.subr.mxu0 0.0
  %1310 = vmatpush1.msra.mxu0 0.0
  %1311 = vmatprep.subr.mxu0 0.0
  %1312 = vmatpush1.msra.mxu0 0.0
  %1313 = vmatprep.subr.mxu0 0.0
  %1314 = vmatpush1.msra.mxu0 0.0
  %1315 = vmatprep.mubr.f32.mxu0 0.0
  %1316 = vmatmul.mubr.f32.gmra.mrb[0].mxu0 %v1249
  %v1317 = vpop.f32.mrb[0].mxu0
  %v1318 = vadd.f32 0.0, %v1317
  %v1319 = vpop.f32.mrb[0].mxu0
  %1320 = vdwg.mxu0
  %v1321 = vadd.f32 %v1236, %v1318
  %s1322 = scalar_lea.vmem [#allocation2], 13
  %v1323 = vld [vmem:[%s1322] ss:$16 sm:$0x3]
  %s1324 = scalar_lea.vmem %s5, 832
  %v1325 = vld [vmem:[%s1324] sm:$0xff]
  %v1326 = vld [vmem:[%s1324 + $0x8] sm:$0xff]
  %v1327 = vld [vmem:[%s1324 + $0x10] sm:$0xff]
  %v1328 = vld [vmem:[%s1324 + $0x18] sm:$0xff]
  %v1329 = vld [vmem:[%s1324 + $0x20] sm:$0xff]
  %v1330 = vld [vmem:[%s1324 + $0x28] sm:$0xff]
  %v1331 = vld [vmem:[%s1324 + $0x30] sm:$0xff]
  %v1332 = vld [vmem:[%s1324 + $0x38] sm:$0xff]
  %v1334 = vsel %vm51, %v1323, 0
  %1336 = vmatprep.subr.mxu0 0.0
  %1337 = vmatpush1.msra.mxu0 %v1325
  %1338 = vmatprep.subr.mxu0 0.0
  %1339 = vmatpush1.msra.mxu0 %v1326
  %1340 = vmatprep.subr.mxu0 0.0
  %1341 = vmatpush1.msra.mxu0 %v1327
  %1342 = vmatprep.subr.mxu0 0.0
  %1343 = vmatpush1.msra.mxu0 %v1328
  %1344 = vmatprep.subr.mxu0 0.0
  %1345 = vmatpush1.msra.mxu0 %v1329
  %1346 = vmatprep.subr.mxu0 0.0
  %1347 = vmatpush1.msra.mxu0 %v1330
  %1348 = vmatprep.subr.mxu0 0.0
  %1349 = vmatpush1.msra.mxu0 %v1331
  %1350 = vmatprep.subr.mxu0 0.0
  %1351 = vmatpush1.msra.mxu0 %v1332
  %1352 = vmatprep.subr.mxu0 0.0
  %1353 = vmatpush1.msra.mxu0 0.0
  %1354 = vmatprep.subr.mxu0 0.0
  %1355 = vmatpush1.msra.mxu0 0.0
  %1356 = vmatprep.subr.mxu0 0.0
  %1357 = vmatpush1.msra.mxu0 0.0
  %1358 = vmatprep.subr.mxu0 0.0
  %1359 = vmatpush1.msra.mxu0 0.0
  %1360 = vmatprep.subr.mxu0 0.0
  %1361 = vmatpush1.msra.mxu0 0.0
  %1362 = vmatprep.subr.mxu0 0.0
  %1363 = vmatpush1.msra.mxu0 0.0
  %1364 = vmatprep.subr.mxu0 0.0
  %1365 = vmatpush1.msra.mxu0 0.0
  %1366 = vmatprep.subr.mxu0 0.0
  %1367 = vmatpush1.msra.mxu0 0.0
  %1368 = vmatprep.subr.mxu0 0.0
  %1369 = vmatpush1.msra.mxu0 0.0
  %1370 = vmatprep.subr.mxu0 0.0
  %1371 = vmatpush1.msra.mxu0 0.0
  %1372 = vmatprep.subr.mxu0 0.0
  %1373 = vmatpush1.msra.mxu0 0.0
  %1374 = vmatprep.subr.mxu0 0.0
  %1375 = vmatpush1.msra.mxu0 0.0
  %1376 = vmatprep.subr.mxu0 0.0
  %1377 = vmatpush1.msra.mxu0 0.0
  %1378 = vmatprep.subr.mxu0 0.0
  %1379 = vmatpush1.msra.mxu0 0.0
  %1380 = vmatprep.subr.mxu0 0.0
  %1381 = vmatpush1.msra.mxu0 0.0
  %1382 = vmatprep.subr.mxu0 0.0
  %1383 = vmatpush1.msra.mxu0 0.0
  %1384 = vmatprep.subr.mxu0 0.0
  %1385 = vmatpush1.msra.mxu0 0.0
  %1386 = vmatprep.subr.mxu0 0.0
  %1387 = vmatpush1.msra.mxu0 0.0
  %1388 = vmatprep.subr.mxu0 0.0
  %1389 = vmatpush1.msra.mxu0 0.0
  %1390 = vmatprep.subr.mxu0 0.0
  %1391 = vmatpush1.msra.mxu0 0.0
  %1392 = vmatprep.subr.mxu0 0.0
  %1393 = vmatpush1.msra.mxu0 0.0
  %1394 = vmatprep.subr.mxu0 0.0
  %1395 = vmatpush1.msra.mxu0 0.0
  %1396 = vmatprep.subr.mxu0 0.0
  %1397 = vmatpush1.msra.mxu0 0.0
  %1398 = vmatprep.subr.mxu0 0.0
  %1399 = vmatpush1.msra.mxu0 0.0
  %1400 = vmatprep.mubr.f32.mxu0 0.0
  %1401 = vmatmul.mubr.f32.gmra.mrb[0].mxu0 %v1334
  %v1402 = vpop.f32.mrb[0].mxu0
  %v1403 = vadd.f32 0.0, %v1402
  %v1404 = vpop.f32.mrb[0].mxu0
  %1405 = vdwg.mxu0
  %v1406 = vadd.f32 %v1321, %v1403
  %s1407 = scalar_lea.vmem [#allocation2], 14
  %v1408 = vld [vmem:[%s1407] ss:$16 sm:$0x3]
  %s1409 = scalar_lea.vmem %s5, 896
  %v1410 = vld [vmem:[%s1409] sm:$0xff]
  %v1411 = vld [vmem:[%s1409 + $0x8] sm:$0xff]
  %v1412 = vld [vmem:[%s1409 + $0x10] sm:$0xff]
  %v1413 = vld [vmem:[%s1409 + $0x18] sm:$0xff]
  %v1414 = vld [vmem:[%s1409 + $0x20] sm:$0xff]
  %v1415 = vld [vmem:[%s1409 + $0x28] sm:$0xff]
  %v1416 = vld [vmem:[%s1409 + $0x30] sm:$0xff]
  %v1417 = vld [vmem:[%s1409 + $0x38] sm:$0xff]
  %v1419 = vsel %vm51, %v1408, 0
  %1421 = vmatprep.subr.mxu0 0.0
  %1422 = vmatpush1.msra.mxu0 %v1410
  %1423 = vmatprep.subr.mxu0 0.0
  %1424 = vmatpush1.msra.mxu0 %v1411
  %1425 = vmatprep.subr.mxu0 0.0
  %1426 = vmatpush1.msra.mxu0 %v1412
  %1427 = vmatprep.subr.mxu0 0.0
  %1428 = vmatpush1.msra.mxu0 %v1413
  %1429 = vmatprep.subr.mxu0 0.0
  %1430 = vmatpush1.msra.mxu0 %v1414
  %1431 = vmatprep.subr.mxu0 0.0
  %1432 = vmatpush1.msra.mxu0 %v1415
  %1433 = vmatprep.subr.mxu0 0.0
  %1434 = vmatpush1.msra.mxu0 %v1416
  %1435 = vmatprep.subr.mxu0 0.0
  %1436 = vmatpush1.msra.mxu0 %v1417
  %1437 = vmatprep.subr.mxu0 0.0
  %1438 = vmatpush1.msra.mxu0 0.0
  %1439 = vmatprep.subr.mxu0 0.0
  %1440 = vmatpush1.msra.mxu0 0.0
  %1441 = vmatprep.subr.mxu0 0.0
  %1442 = vmatpush1.msra.mxu0 0.0
  %1443 = vmatprep.subr.mxu0 0.0
  %1444 = vmatpush1.msra.mxu0 0.0
  %1445 = vmatprep.subr.mxu0 0.0
  %1446 = vmatpush1.msra.mxu0 0.0
  %1447 = vmatprep.subr.mxu0 0.0
  %1448 = vmatpush1.msra.mxu0 0.0
  %1449 = vmatprep.subr.mxu0 0.0
  %1450 = vmatpush1.msra.mxu0 0.0
  %1451 = vmatprep.subr.mxu0 0.0
  %1452 = vmatpush1.msra.mxu0 0.0
  %1453 = vmatprep.subr.mxu0 0.0
  %1454 = vmatpush1.msra.mxu0 0.0
  %1455 = vmatprep.subr.mxu0 0.0
  %1456 = vmatpush1.msra.mxu0 0.0
  %1457 = vmatprep.subr.mxu0 0.0
  %1458 = vmatpush1.msra.mxu0 0.0
  %1459 = vmatprep.subr.mxu0 0.0
  %1460 = vmatpush1.msra.mxu0 0.0
  %1461 = vmatprep.subr.mxu0 0.0
  %1462 = vmatpush1.msra.mxu0 0.0
  %1463 = vmatprep.subr.mxu0 0.0
  %1464 = vmatpush1.msra.mxu0 0.0
  %1465 = vmatprep.subr.mxu0 0.0
  %1466 = vmatpush1.msra.mxu0 0.0
  %1467 = vmatprep.subr.mxu0 0.0
  %1468 = vmatpush1.msra.mxu0 0.0
  %1469 = vmatprep.subr.mxu0 0.0
  %1470 = vmatpush1.msra.mxu0 0.0
  %1471 = vmatprep.subr.mxu0 0.0
  %1472 = vmatpush1.msra.mxu0 0.0
  %1473 = vmatprep.subr.mxu0 0.0
  %1474 = vmatpush1.msra.mxu0 0.0
  %1475 = vmatprep.subr.mxu0 0.0
  %1476 = vmatpush1.msra.mxu0 0.0
  %1477 = vmatprep.subr.mxu0 0.0
  %1478 = vmatpush1.msra.mxu0 0.0
  %1479 = vmatprep.subr.mxu0 0.0
  %1480 = vmatpush1.msra.mxu0 0.0
  %1481 = vmatprep.subr.mxu0 0.0
  %1482 = vmatpush1.msra.mxu0 0.0
  %1483 = vmatprep.subr.mxu0 0.0
  %1484 = vmatpush1.msra.mxu0 0.0
  %1485 = vmatprep.mubr.f32.mxu0 0.0
  %1486 = vmatmul.mubr.f32.gmra.mrb[0].mxu0 %v1419
  %v1487 = vpop.f32.mrb[0].mxu0
  %v1488 = vadd.f32 0.0, %v1487
  %v1489 = vpop.f32.mrb[0].mxu0
  %1490 = vdwg.mxu0
  %v1491 = vadd.f32 %v1406, %v1488
  %s1492 = scalar_lea.vmem [#allocation2], 15
  %v1493 = vld [vmem:[%s1492] ss:$16 sm:$0x3]
  %s1494 = scalar_lea.vmem %s5, 960
  %v1495 = vld [vmem:[%s1494] sm:$0xff]
  %v1496 = vld [vmem:[%s1494 + $0x8] sm:$0xff]
  %v1497 = vld [vmem:[%s1494 + $0x10] sm:$0xff]
  %v1498 = vld [vmem:[%s1494 + $0x18] sm:$0xff]
  %v1499 = vld [vmem:[%s1494 + $0x20] sm:$0xff]
  %v1500 = vld [vmem:[%s1494 + $0x28] sm:$0xff]
  %v1501 = vld [vmem:[%s1494 + $0x30] sm:$0xff]
  %v1502 = vld [vmem:[%s1494 + $0x38] sm:$0xff]
  %v1504 = vsel %vm51, %v1493, 0
  %1506 = vmatprep.subr.mxu0 0.0
  %1507 = vmatpush1.msra.mxu0 %v1495
  %1508 = vmatprep.subr.mxu0 0.0
  %1509 = vmatpush1.msra.mxu0 %v1496
  %1510 = vmatprep.subr.mxu0 0.0
  %1511 = vmatpush1.msra.mxu0 %v1497
  %1512 = vmatprep.subr.mxu0 0.0
  %1513 = vmatpush1.msra.mxu0 %v1498
  %1514 = vmatprep.subr.mxu0 0.0
  %1515 = vmatpush1.msra.mxu0 %v1499
  %1516 = vmatprep.subr.mxu0 0.0
  %1517 = vmatpush1.msra.mxu0 %v1500
  %1518 = vmatprep.subr.mxu0 0.0
  %1519 = vmatpush1.msra.mxu0 %v1501
  %1520 = vmatprep.subr.mxu0 0.0
  %1521 = vmatpush1.msra.mxu0 %v1502
  %1522 = vmatprep.subr.mxu0 0.0
  %1523 = vmatpush1.msra.mxu0 0.0
  %1524 = vmatprep.subr.mxu0 0.0
  %1525 = vmatpush1.msra.mxu0 0.0
  %1526 = vmatprep.subr.mxu0 0.0
  %1527 = vmatpush1.msra.mxu0 0.0
  %1528 = vmatprep.subr.mxu0 0.0
  %1529 = vmatpush1.msra.mxu0 0.0
  %1530 = vmatprep.subr.mxu0 0.0
  %1531 = vmatpush1.msra.mxu0 0.0
  %1532 = vmatprep.subr.mxu0 0.0
  %1533 = vmatpush1.msra.mxu0 0.0
  %1534 = vmatprep.subr.mxu0 0.0
  %1535 = vmatpush1.msra.mxu0 0.0
  %1536 = vmatprep.subr.mxu0 0.0
  %1537 = vmatpush1.msra.mxu0 0.0
  %1538 = vmatprep.subr.mxu0 0.0
  %1539 = vmatpush1.msra.mxu0 0.0
  %1540 = vmatprep.subr.mxu0 0.0
  %1541 = vmatpush1.msra.mxu0 0.0
  %1542 = vmatprep.subr.mxu0 0.0
  %1543 = vmatpush1.msra.mxu0 0.0
  %1544 = vmatprep.subr.mxu0 0.0
  %1545 = vmatpush1.msra.mxu0 0.0
  %1546 = vmatprep.subr.mxu0 0.0
  %1547 = vmatpush1.msra.mxu0 0.0
  %1548 = vmatprep.subr.mxu0 0.0
  %1549 = vmatpush1.msra.mxu0 0.0
  %1550 = vmatprep.subr.mxu0 0.0
  %1551 = vmatpush1.msra.mxu0 0.0
  %1552 = vmatprep.subr.mxu0 0.0
  %1553 = vmatpush1.msra.mxu0 0.0
  %1554 = vmatprep.subr.mxu0 0.0
  %1555 = vmatpush1.msra.mxu0 0.0
  %1556 = vmatprep.subr.mxu0 0.0
  %1557 = vmatpush1.msra.mxu0 0.0
  %1558 = vmatprep.subr.mxu0 0.0
  %1559 = vmatpush1.msra.mxu0 0.0
  %1560 = vmatprep.subr.mxu0 0.0
  %1561 = vmatpush1.msra.mxu0 0.0
  %1562 = vmatprep.subr.mxu0 0.0
  %1563 = vmatpush1.msra.mxu0 0.0
  %1564 = vmatprep.subr.mxu0 0.0
  %1565 = vmatpush1.msra.mxu0 0.0
  %1566 = vmatprep.subr.mxu0 0.0
  %1567 = vmatpush1.msra.mxu0 0.0
  %1568 = vmatprep.subr.mxu0 0.0
  %1569 = vmatpush1.msra.mxu0 0.0
  %1570 = vmatprep.mubr.f32.mxu0 0.0
  %1571 = vmatmul.mubr.f32.gmra.mrb[0].mxu0 %v1504
  %v1572 = vpop.f32.mrb[0].mxu0
  %v1573 = vadd.f32 0.0, %v1572
  %v1574 = vpop.f32.mrb[0].mxu0
  %1575 = vdwg.mxu0
  %v1576 = vadd.f32 %v1491, %v1573
  %v1577 = vld [vmem:[%s6] sm:$0x1]
  %v1579 = vlaneseq
  %v1580 = vshrl.u32 %v1579, 7
  %v1581 = vsub.s32 0, %v1580
  %v1582 = vrot.slane %v1577, %v1581
  %v1584 = vadd.f32 %v1576, %v1582
  %vm1585 = vcmask 517120
  %v1586 = vsel %vm1585, %v1584, 0.0
  %v1587 = vrot.slane %v1586, 4
  %v1588 = vadd.f32 %v1586, %v1587
  %v1589 = vrot.slane %v1588, 2
  %v1590 = vadd.f32 %v1588, %v1589
  %v1591 = vrot.slane %v1590, 1
  %v1592 = vadd.f32 %v1590, %v1591
  %v1593 = vrcp.pop 2.0
  %v1594 = vmul.f32 %v1592, %v1593
  %v1595 = vsub.f32 %v1584, %v1594
  %v1596 = vmul.f32 %v1595, %v1595
  %v1597 = vsel %vm1585, %v1596, 0.0
  %v1598 = vrot.slane %v1597, 4
  %v1599 = vadd.f32 %v1597, %v1598
  %v1600 = vrot.slane %v1599, 2
  %v1601 = vadd.f32 %v1599, %v1600
  %v1602 = vrot.slane %v1601, 1
  %v1603 = vadd.f32 %v1601, %v1602
  %v1604 = vmul.f32 %v1603, %v1593
  %v1605 = vld [vmem:[%s7] sm:$0x1]
  %v1606 = vadd.f32 %v1604, 1e-05
  %v1607 = vrsqrt.pop %v1606
  %v1608 = vmul.f32 %v1605, %v1607
  %v1609 = vld [vmem:[%s8] sm:$0x1]
  %v1610 = vmul.f32 %v1594, %v1608
  %v1611 = vsub.f32 %v1609, %v1610
  %v1613 = vlaneseq
  %v1614 = vshrl.u32 %v1613, 7
  %v1615 = vsub.s32 0, %v1614
  %v1616 = vrot.slane %v1608, %v1615
  %v1618 = vmul.f32 %v1584, %v1616
  %v1620 = vlaneseq
  %v1621 = vshrl.u32 %v1620, 7
  %v1622 = vsub.s32 0, %v1621
  %v1623 = vrot.slane %v1611, %v1622
  %v1625 = vadd.f32 %v1618, %v1623
  %v1626 = vmax.f32 %v1625, 0.0
  %1627 = vst.msk [vmem:[%s9] sm:$0x3] %vm1585, %v1626
  // Predicated region
  $region38: #{prediction_network_forward.1} parent=0 // pred_check
    _
  $region39: #{prediction_network_forward.1} parent=0 // pred_check_branch
    %1629 = sbr.rel (0) target = $region41
  $region40: #{prediction_network_forward.1} parent=0 // pred_region
    _
  $region41: #{prediction_network_forward.1} parent=0 // pred_fallthru
    _
  // Predicated region
  $region42: #{prediction_network_forward.1} parent=0 // pred_check
    _
  $region43: #{prediction_network_forward.1} parent=0 // pred_check_branch
    %1631 = sbr.rel (0) target = $region45
  $region44: #{prediction_network_forward.1} parent=0 // pred_region
    _
  $region45: #{prediction_network_forward.1} parent=0 // pred_fallthru
    _

</llo_original>
